<compile_context>
chip_gen: v5e
topology: v5e:2x2
jax: 0.10.0
libtpu: 0.0.40
codegen_flags: <defaults>
</compile_context>

<pallas_src>
import math

import jax
import jax.numpy as jnp
from jax import lax
from jax.experimental import pallas as pl
from jax.experimental.pallas import tpu as pltpu


_GATHER_PREFETCH_DEPTH = 8  # rows in flight per grid step on the gather path


def _round_up(x: int, m: int) -> int:
    return (x + m - 1) // m * m


def _vmem_capacity_bytes() -> int:
    """Best-effort query of physical VMEM; conservative (v7x-sized) default."""
    try:
        info = pltpu.get_tpu_info()
        for attr in ("vmem_capacity_bytes", "vmem_size_bytes"):
            cap = getattr(info, attr, None)
            if cap:
                return int(cap)
    except Exception:
        pass
    return 64 * 1024 * 1024


# --------------------------------------------------------------------------- #
# Small-vocab path: one-hot matmul against a VMEM-resident (single copy) table.
# --------------------------------------------------------------------------- #
def _embedding_onehot_kernel(ids_ref, table_ref, out_ref):
    # ids_ref:   VMEM (TM, 1) int32  -- token tile of ids
    # table_ref: VMEM (V, Dp)        -- whole table, single resident copy
    # out_ref:   VMEM (TM, Dp)       -- token tile of the output
    ids = ids_ref[...]                                     # (TM, 1)
    v = table_ref.shape[0]
    # (1, V) iota broadcast against (TM, 1) ids: only V elements of iota work per
    # step (vs TM*V before); the compare/select still runs at (TM, V) on the VPU.
    col = lax.broadcasted_iota(jnp.int32, (1, v), 1)
    one_hot = (col == ids).astype(table_ref.dtype)         # exact 0/1, (TM, V)
    # HIGHEST keeps f32 table rows accurate through the MXU (3-pass bf16
    # reconstruction); bf16 tables are exact at default precision.
    prec = lax.Precision.HIGHEST if table_ref.dtype == jnp.float32 else None
    out_ref[...] = jnp.dot(
        one_hot, table_ref[...],
        preferred_element_type=jnp.float32, precision=prec,
    ).astype(out_ref.dtype)


# --------------------------------------------------------------------------- #
# General path: true row gather via manual HBM->VMEM row DMAs (table stays in HBM).
# --------------------------------------------------------------------------- #
def _embedding_gather_kernel(ids_ref, table_ref, out_ref, sem):
    # ids_ref:   SMEM (N_pad,) int32  -- scalar-prefetched ids
    # table_ref: HBM  (V, D)          -- memory_space=pl.ANY, never copied whole
    # out_ref:   VMEM (TM, D)         -- token tile of the output (written by DMA)
    # sem:       DMA semaphores, ring of _GATHER_PREFETCH_DEPTH
    tm = out_ref.shape[0]
    v = table_ref.shape[0]
    nbuf = _GATHER_PREFETCH_DEPTH
    base = pl.program_id(0) * tm

    def start_row(t):
        # Clamp out-of-range ids (PyTorch would raise) so we never issue an OOB DMA.
        rid = jnp.clip(ids_ref[base + t], 0, v - 1)
        pltpu.make_async_copy(
            table_ref.at[pl.ds(rid, 1), :],
            out_ref.at[pl.ds(t, 1), :],
            sem.at[t % nbuf],
        ).start()

    def wait_row(t):
        # Only the transfer size / semaphore slot matter for the wait, so use a
        # fixed source row and avoid a redundant SMEM read.
        pltpu.make_async_copy(
            table_ref.at[pl.ds(0, 1), :],
            out_ref.at[pl.ds(t, 1), :],
            sem.at[t % nbuf],
        ).wait()

    # Prime the prefetch window.
    @pl.loop(0, min(nbuf, tm))
    def _(t):
        start_row(t)

    # Sliding window: wait row t, immediately issue row t + nbuf.
    @pl.loop(0, tm)
    def _(t):
        wait_row(t)

        @pl.when(t + nbuf < tm)
        def _():
            start_row(t + nbuf)


# --------------------------------------------------------------------------- #
# Wrapper
# --------------------------------------------------------------------------- #
def fixed_embedding(ids: jax.Array, table: jax.Array, *,
                    tokens_per_tile: int = 256,
                    onehot_vocab_cutoff: int | None = None,
                    max_table_vmem_bytes: int | None = None) -> jax.Array:
    """Equivalent of FixedEmbedding.forward: table[ids] -> ids.shape + (D,)."""
    lead_shape = ids.shape
    V, D = table.shape
    N = int(math.prod(lead_shape)) if lead_shape else 1

    flat_ids = ids.reshape(-1).astype(jnp.int32)

    dsize = jnp.dtype(table.dtype).itemsize
    cap = _vmem_capacity_bytes()
    if max_table_vmem_bytes is None:
        # Resident table is single-buffered now, so ~half of VMEM is usable.
        max_table_vmem_bytes = cap // 2
    if onehot_vocab_cutoff is None:
        # Compute-aware cutoff: per token the one-hot matmul does V*D MACs for D
        # useful outputs; past a few K rows the MXU time exceeds the (TM, D)
        # writeback on every generation and the row gather wins.
        onehot_vocab_cutoff = 2048 if dsize <= 2 else 1024

    TM = min(tokens_per_tile, _round_up(N, 8))
    N_pad = _round_up(N, TM)
    if N_pad != N:
        flat_ids = jnp.pad(flat_ids, (0, N_pad - N))
    grid = (N_pad // TM,)

    Dp = _round_up(D, 128)
    table_fits = V * Dp * dsize <= max_table_vmem_bytes
    use_onehot = (jnp.issubdtype(table.dtype, jnp.floating)
                  and V <= onehot_vocab_cutoff
                  and table_fits)

    if use_onehot:
        # ----------------------- resident one-hot MXU path ------------------ #
        table_p = table if Dp == D else jnp.pad(table, ((0, 0), (0, Dp - D)))
        ids2d = flat_ids.reshape(N_pad, 1)

        vmem_limit = int(min(
            int(0.9 * cap),
            max(32 << 20,
                V * Dp * dsize              # resident table (single copy)
                + 3 * TM * V * 4            # one-hot / compare intermediates
                + 4 * TM * Dp * dsize       # double-buffered output tiles + result
                + 2 * TM * 128 * 4          # double-buffered (TM, 1) ids tiles
                + (8 << 20)),
        ))

        out_flat = pl.pallas_call(
            _embedding_onehot_kernel,
            out_shape=jax.ShapeDtypeStruct((N_pad, Dp), table.dtype),
            grid_spec=pltpu.PrefetchScalarGridSpec(
                num_scalar_prefetch=0,
                grid=grid,
                in_specs=[
                    pl.BlockSpec((TM, 1), lambda i: (i, 0)),
                    # Whole table as a single (un-pipelined, single-buffered)
                    # VMEM operand: loaded from HBM exactly once.
                    pl.BlockSpec(memory_space=pltpu.MemorySpace.VMEM),
                ],
                out_specs=pl.BlockSpec((TM, Dp), lambda i: (i, 0)),
            ),
            compiler_params=pltpu.CompilerParams(
                dimension_semantics=("parallel",),
                vmem_limit_bytes=vmem_limit),
        )(ids2d, table_p)
        if Dp != D:
            out_flat = out_flat[:, :D]
    else:
        # ----------------------------- row gather --------------------------- #
        # Table stays in HBM (no padding, no whole-table streaming); ids live in
        # SMEM via scalar prefetch so the kernel can compute DMA addresses.
        # TODO(synk): if D is not a multiple of 128, only the HBM writeback DMA
        # layout is affected here (rows are written by DMA, not vector stores).
        out_flat = pl.pallas_call(
            _embedding_gather_kernel,
            out_shape=jax.ShapeDtypeStruct((N_pad, D), table.dtype),
            grid_spec=pltpu.PrefetchScalarGridSpec(
                num_scalar_prefetch=1,
                grid=grid,
                in_specs=[pl.BlockSpec(memory_space=pl.ANY)],
                out_specs=pl.BlockSpec((TM, D), lambda i, ids: (i, 0)),
                scratch_shapes=[
                    pltpu.SemaphoreType.DMA((_GATHER_PREFETCH_DEPTH,)),
                ],
            ),
            # "arbitrary": the manual DMA-semaphore scratch must not be shared
            # across megacore halves; parallel-vs-arbitrary is perf-neutral here.
            compiler_params=pltpu.CompilerParams(
                dimension_semantics=("arbitrary",)),
        )(flat_ids, table)

    return out_flat[:N].reshape(*lead_shape, D)


if __name__ == "__main__":
    key = jax.random.PRNGKey(0)
    k_tab, k_ids = jax.random.split(key)

    # Small synthetic shapes consistent with the module:
    #   vocab V, embedding_dim D, batch B, sequence S.
    V, D = 512, 128
    B, S = 2, 8

    # nn.Embedding default init is N(0, 1) on the weight table.
    table = jax.random.normal(k_tab, (V, D), dtype=jnp.float32)
    ids = jax.random.randint(k_ids, (B, S), 0, V, dtype=jnp.int32)

    # Reference: plain JAX gather (== torch nn.Embedding forward).
    ref = table[ids]

    # Small-vocab path: VMEM-resident (single-buffered) table, one-hot MXU gather.
    out = fixed_embedding(ids, table)
    out = jax.block_until_ready(out)
    assert out.shape == (B, S, D), out.shape
    assert out.dtype == table.dtype, out.dtype
    assert jnp.allclose(out, ref), "one-hot resident-table path mismatch vs reference"

    # Force the row-gather path (the default for the module's 100K-row table).
    out_g = fixed_embedding(ids, table, onehot_vocab_cutoff=0)
    out_g = jax.block_until_ready(out_g)
    assert out_g.shape == (B, S, D), out_g.shape
    assert jnp.allclose(out_g, ref), "row-gather path mismatch vs reference"

    print("KERNEL_OK")
</pallas_src>

<mosaic_0001>
module attributes {stable_mosaic.version = 11 : i64} {
  func.func @_embedding_onehot_kernel(%arg0: i32, %arg1: memref<16x1xi32, #tpu.memory_space<vmem>>, %arg2: memref<512x128xf32, #tpu.memory_space<vmem>>, %arg3: memref<16x128xf32, #tpu.memory_space<vmem>>) attributes {dimension_semantics = [#tpu.dimension_semantics<parallel>], iteration_bounds = array<i64: 1>, scalar_prefetch = 0 : i64, scratch_operands = 0 : i64, tpu.core_type = #tpu.core_type<tc>, window_params = [{transform_indices = @transform_0, window_bounds = array<i64: 16, 1>}, {pipeline_mode = #tpu.pipeline_mode<synchronous>, transform_indices = @transform_1, window_bounds = array<i64: 512, 128>}, {transform_indices = @transform_2, window_bounds = array<i64: 16, 128>}]} {
    %c0 = arith.constant 0 : index
    %c0_0 = arith.constant 0 : index
    %0 = vector.load %arg1[%c0, %c0_0] : memref<16x1xi32, #tpu.memory_space<vmem>>, vector<16x1xi32>
    %1 = tpu.iota {dimensions = array<i32: 1>} : vector<1x512xi32>
    %2 = vector.broadcast %1 : vector<1x512xi32> to vector<16x512xi32>
    %3 = vector.broadcast %0 : vector<16x1xi32> to vector<16x512xi32>
    %4 = arith.cmpi eq, %2, %3 : vector<16x512xi32>
    %5 = arith.extui %4 : vector<16x512xi1> to vector<16x512xi32>
    %6 = arith.sitofp %5 : vector<16x512xi32> to vector<16x512xf32>
    %c0_1 = arith.constant 0 : index
    %c0_2 = arith.constant 0 : index
    %7 = vector.load %arg2[%c0_1, %c0_2] : memref<512x128xf32, #tpu.memory_space<vmem>>, vector<512x128xf32>
    %cst = arith.constant dense<0.000000e+00> : vector<16x128xf32>
    %8 = tpu.matmul %6, %7, %cst {dimension_numbers = #tpu.dot_dimension_numbers<[1], [0], [0], [1], [0, 0, 1, 1], [], []>, precision = #tpu.contract_precision<fp32>} : vector<16x512xf32>, vector<512x128xf32>, vector<16x128xf32> -> vector<16x128xf32>
    %c0_3 = arith.constant 0 : index
    %c0_4 = arith.constant 0 : index
    %9 = vector.load %arg3[%c0_3, %c0_4] : memref<16x128xf32, #tpu.memory_space<vmem>>, vector<16x128xf32>
    tpu.vector_store %arg3[%c0_3, %c0_4], %8 {strides = array<i32>} : memref<16x128xf32, #tpu.memory_space<vmem>>, vector<16x128xf32>,
    return
  }
  func.func @transform_0(%arg0: i32) -> (i32, i32) {
    %c0_i32 = arith.constant 0 : i32
    %c0_i32_0 = arith.constant 0 : i32
    return %arg0, %c0_i32 : i32, i32
  }
  func.func @transform_1(%arg0: i32) -> (i32, i32) {
    %c0_i32 = arith.constant 0 : i32
    %c0_i32_0 = arith.constant 0 : i32
    %c0_i32_1 = arith.constant 0 : i32
    return %c0_i32, %c0_i32_0 : i32, i32
  }
  func.func @transform_2(%arg0: i32) -> (i32, i32) {
    %c0_i32 = arith.constant 0 : i32
    %c0_i32_0 = arith.constant 0 : i32
    return %arg0, %c0_i32 : i32, i32
  }
}

</mosaic_0001>

<llo_original>
// kernel: tpu_custom_call.1
$region0: #{tpu_custom_call.1}
  #allocation0 [shape = 'u32[]', space=smem, size = 0x4, offset = 0x4, fixed_abs, tag = 'smem constant byte address 0x4 - core index']
  #allocation1 [shape = 'u32[72,128]{1,0:T(1,128)}', space=vmem, size = 0x9000, scoped, tag = 'internal scratch']
  %s0 = inlined_call_operand.vmem [shape: s32[16,1], index: 0, kind: input, shape index: {}]
  %s1 = inlined_call_operand.hbm [shape: f32[512,128], index: 1, kind: input, shape index: {}]
  %s2 = inlined_call_operand.hbm [shape: f32[16,128], index: 2, kind: output, shape index: {}]
  %s3 = sld [smem:[#allocation0]]
  $region22: #{tpu_custom_call.1} parent=0
    _
  %s5 = ssub.s32 1, %s3
  %s6 = scalar_select 0, %s5, %s3
  $region1: #{tpu_custom_call.1} parent=0
    #allocation2 [shape = 'u8[262144]{0}', space=vmem, size = 0x40000, scoped, tag = 'input window, operand 1, single buffered']
    #allocation3 [shape = 's32[1]{0}', space=sflag, size = 0x4, scoped, tag = 'scoped memory for tpu_custom_call.1']
    #allocation4 [shape = 's32[1]{0}', space=sflag, size = 0x4, scoped, tag = 'scoped memory for tpu_custom_call.1']
    #allocation5 [shape = 'u8[8192]{0}', space=vmem, size = 0x2000, scoped, tag = 'output window, operand 0, single buffered']
    %7 = vsyncpa [#allocation3], 0
    %8 = vsyncpa [#allocation4], 0
    // Predicated region
    $region2: #{tpu_custom_call.1} parent=1 // pred_check
      _
    $region3: #{tpu_custom_call.1} parent=1 // pred_check_branch
      %10 = sbr.rel (0) target = $region5
    $region4: #{tpu_custom_call.1} parent=1 // pred_region
      _
    $region5: #{tpu_custom_call.1} parent=1 // pred_fallthru
      _
    // Predicated region
    $region6: #{tpu_custom_call.1} parent=1 // pred_check
      _
    $region7: #{tpu_custom_call.1} parent=1 // pred_check_branch
      %12 = sbr.rel (0) target = $region9
    $region8: #{tpu_custom_call.1} parent=1 // pred_region
      %14 = vsyncadd [#allocation3], 0
      %s15 = sshll.u32 %s1, 4
      %s16 = int_to_ptr.hbm [resolvable:$true] %s15
      %s17 = sshll.u32 [#allocation2], 4
      %s18 = int_to_ptr.vmem [resolvable:$true] %s17
      %23 = dma.hbm_to_vmem [thread:$0]  %s16, 8192, %s18, [#allocation3], 128, 128, 8
    $region9: #{tpu_custom_call.1} parent=1 // pred_fallthru
      _
    // Predicated region
    $region10: #{tpu_custom_call.1} parent=1 // pred_check
      _
    $region11: #{tpu_custom_call.1} parent=1 // pred_check_branch
      %25 = sbr.rel (0) target = $region13
    $region12: #{tpu_custom_call.1} parent=1 // pred_region
      %27 = dma.done [#allocation3], 8192
    $region13: #{tpu_custom_call.1} parent=1 // pred_fallthru
      _
    %v28 = vld [vmem:[%s0] sm:$0xff]
    %v29 = vld [vmem:[%s0 + $0x8] sm:$0xff]
    %v30 = vlaneseq
    %v31 = vand.u32 %v30, 127
    %v32 = vadd.s32 %v31, 128
    %v33 = vadd.s32 %v31, 256
    %v34 = vadd.s32 %v31, 384
    %35 = vset.pattern.permute.xlu0 0
    %36 = vperm.xlu0 %35, %v28
    %v37 = vpop.permute.xlu0 %36
    %38 = vset.pattern.permute.xlu0 0
    %39 = vperm.xlu0 %38, %v29
    %v40 = vpop.permute.xlu0 %39
    %vm41 = vcmp.eq.s32.totalorder %v31, %v37
    %vm42 = vcmp.eq.s32.totalorder %v32, %v37
    %vm43 = vcmp.eq.s32.totalorder %v33, %v37
    %vm44 = vcmp.eq.s32.totalorder %v34, %v37
    %vm45 = vcmp.eq.s32.totalorder %v31, %v40
    %vm46 = vcmp.eq.s32.totalorder %v32, %v40
    %vm47 = vcmp.eq.s32.totalorder %v33, %v40
    %vm48 = vcmp.eq.s32.totalorder %v34, %v40
    %v49 = vsel %vm41, 1, 0
    %v50 = vsel %vm42, 1, 0
    %v51 = vsel %vm43, 1, 0
    %v52 = vsel %vm44, 1, 0
    %v53 = vsel %vm45, 1, 0
    %v54 = vsel %vm46, 1, 0
    %v55 = vsel %vm47, 1, 0
    %v56 = vsel %vm48, 1, 0
    %v57 = vcvt.s32.f32 %v49
    %v58 = vcvt.s32.f32 %v50
    %v59 = vcvt.s32.f32 %v51
    %v60 = vcvt.s32.f32 %v52
    %v61 = vcvt.s32.f32 %v53
    %v62 = vcvt.s32.f32 %v54
    %v63 = vcvt.s32.f32 %v55
    %v64 = vcvt.s32.f32 %v56
    %v65 = vld [vmem:[#allocation2] sm:$0xff]
    %v66 = vld [vmem:[#allocation2 + $0x8] sm:$0xff]
    %v67 = vld [vmem:[#allocation2 + $0x10] sm:$0xff]
    %v68 = vld [vmem:[#allocation2 + $0x18] sm:$0xff]
    %v69 = vld [vmem:[#allocation2 + $0x20] sm:$0xff]
    %v70 = vld [vmem:[#allocation2 + $0x28] sm:$0xff]
    %v71 = vld [vmem:[#allocation2 + $0x30] sm:$0xff]
    %v72 = vld [vmem:[#allocation2 + $0x38] sm:$0xff]
    %v73 = vld [vmem:[#allocation2 + $0x40] sm:$0xff]
    %v74 = vld [vmem:[#allocation2 + $0x48] sm:$0xff]
    %v75 = vld [vmem:[#allocation2 + $0x50] sm:$0xff]
    %v76 = vld [vmem:[#allocation2 + $0x58] sm:$0xff]
    %v77 = vld [vmem:[#allocation2 + $0x60] sm:$0xff]
    %v78 = vld [vmem:[#allocation2 + $0x68] sm:$0xff]
    %v79 = vld [vmem:[#allocation2 + $0x70] sm:$0xff]
    %v80 = vld [vmem:[#allocation2 + $0x78] sm:$0xff]
    %v81 = vld [vmem:[#allocation2 + $0x80] sm:$0xff]
    %v82 = vld [vmem:[#allocation2 + $0x88] sm:$0xff]
    %v83 = vld [vmem:[#allocation2 + $0x90] sm:$0xff]
    %v84 = vld [vmem:[#allocation2 + $0x98] sm:$0xff]
    %v85 = vld [vmem:[#allocation2 + $0xa0] sm:$0xff]
    %v86 = vld [vmem:[#allocation2 + $0xa8] sm:$0xff]
    %v87 = vld [vmem:[#allocation2 + $0xb0] sm:$0xff]
    %v88 = vld [vmem:[#allocation2 + $0xb8] sm:$0xff]
    %v89 = vld [vmem:[#allocation2 + $0xc0] sm:$0xff]
    %v90 = vld [vmem:[#allocation2 + $0xc8] sm:$0xff]
    %v91 = vld [vmem:[#allocation2 + $0xd0] sm:$0xff]
    %v92 = vld [vmem:[#allocation2 + $0xd8] sm:$0xff]
    %v93 = vld [vmem:[#allocation2 + $0xe0] sm:$0xff]
    %v94 = vld [vmem:[#allocation2 + $0xe8] sm:$0xff]
    %v95 = vld [vmem:[#allocation2 + $0xf0] sm:$0xff]
    %v96 = vld [vmem:[#allocation2 + $0xf8] sm:$0xff]
    %v97 = vld [vmem:[#allocation2 + $0x100] sm:$0xff]
    %v98 = vld [vmem:[#allocation2 + $0x108] sm:$0xff]
    %v99 = vld [vmem:[#allocation2 + $0x110] sm:$0xff]
    %v100 = vld [vmem:[#allocation2 + $0x118] sm:$0xff]
    %v101 = vld [vmem:[#allocation2 + $0x120] sm:$0xff]
    %v102 = vld [vmem:[#allocation2 + $0x128] sm:$0xff]
    %v103 = vld [vmem:[#allocation2 + $0x130] sm:$0xff]
    %v104 = vld [vmem:[#allocation2 + $0x138] sm:$0xff]
    %v105 = vld [vmem:[#allocation2 + $0x140] sm:$0xff]
    %v106 = vld [vmem:[#allocation2 + $0x148] sm:$0xff]
    %v107 = vld [vmem:[#allocation2 + $0x150] sm:$0xff]
    %v108 = vld [vmem:[#allocation2 + $0x158] sm:$0xff]
    %v109 = vld [vmem:[#allocation2 + $0x160] sm:$0xff]
    %v110 = vld [vmem:[#allocation2 + $0x168] sm:$0xff]
    %v111 = vld [vmem:[#allocation2 + $0x170] sm:$0xff]
    %v112 = vld [vmem:[#allocation2 + $0x178] sm:$0xff]
    %v113 = vld [vmem:[#allocation2 + $0x180] sm:$0xff]
    %v114 = vld [vmem:[#allocation2 + $0x188] sm:$0xff]
    %v115 = vld [vmem:[#allocation2 + $0x190] sm:$0xff]
    %v116 = vld [vmem:[#allocation2 + $0x198] sm:$0xff]
    %v117 = vld [vmem:[#allocation2 + $0x1a0] sm:$0xff]
    %v118 = vld [vmem:[#allocation2 + $0x1a8] sm:$0xff]
    %v119 = vld [vmem:[#allocation2 + $0x1b0] sm:$0xff]
    %v120 = vld [vmem:[#allocation2 + $0x1b8] sm:$0xff]
    %v121 = vld [vmem:[#allocation2 + $0x1c0] sm:$0xff]
    %v122 = vld [vmem:[#allocation2 + $0x1c8] sm:$0xff]
    %v123 = vld [vmem:[#allocation2 + $0x1d0] sm:$0xff]
    %v124 = vld [vmem:[#allocation2 + $0x1d8] sm:$0xff]
    %v125 = vld [vmem:[#allocation2 + $0x1e0] sm:$0xff]
    %v126 = vld [vmem:[#allocation2 + $0x1e8] sm:$0xff]
    %v127 = vld [vmem:[#allocation2 + $0x1f0] sm:$0xff]
    %v128 = vld [vmem:[#allocation2 + $0x1f8] sm:$0xff]
    %v129 = vand.u32 %v80, 4294901760
    %130 = vmatpush.msra.mxu0 %v129
    %v131 = vand.u32 %v79, 4294901760
    %132 = vmatpush.msra.mxu0 %v131
    %v133 = vand.u32 %v78, 4294901760
    %134 = vmatpush.msra.mxu0 %v133
    %v135 = vand.u32 %v77, 4294901760
    %136 = vmatpush.msra.mxu0 %v135
    %v137 = vand.u32 %v76, 4294901760
    %138 = vmatpush.msra.mxu0 %v137
    %v139 = vand.u32 %v75, 4294901760
    %140 = vmatpush.msra.mxu0 %v139
    %v141 = vand.u32 %v74, 4294901760
    %142 = vmatpush.msra.mxu0 %v141
    %v143 = vand.u32 %v73, 4294901760
    %144 = vmatpush.msra.mxu0 %v143
    %v145 = vand.u32 %v72, 4294901760
    %146 = vmatpush.msra.mxu0 %v145
    %v147 = vand.u32 %v71, 4294901760
    %148 = vmatpush.msra.mxu0 %v147
    %v149 = vand.u32 %v70, 4294901760
    %150 = vmatpush.msra.mxu0 %v149
    %v151 = vand.u32 %v69, 4294901760
    %152 = vmatpush.msra.mxu0 %v151
    %v153 = vand.u32 %v68, 4294901760
    %154 = vmatpush.msra.mxu0 %v153
    %v155 = vand.u32 %v67, 4294901760
    %156 = vmatpush.msra.mxu0 %v155
    %v157 = vand.u32 %v66, 4294901760
    %158 = vmatpush.msra.mxu0 %v157
    %v159 = vand.u32 %v65, 4294901760
    %160 = vmatpush.msra.mxu0 %v159
    %v161 = vand.u32 %v57, 4294901760
    %v162 = vsub.f32 %v57, %v161
    %v163 = vand.u32 %v162, 4294901760
    %v164 = vsub.f32 %v162, %v163
    %v165 = vand.u32 %v164, 4294901760
    %166 = vmatmul.f32.gmra.mxu0 %v165
    %v167 = vpop.f32.mrf.mxu0
    %v168 = vadd.f32 0.0, %v167
    %v169 = vand.u32 %v61, 4294901760
    %v170 = vsub.f32 %v61, %v169
    %v171 = vand.u32 %v170, 4294901760
    %v172 = vsub.f32 %v170, %v171
    %v173 = vand.u32 %v172, 4294901760
    %174 = vmatmul.f32.gmra.mxu0 %v173
    %v175 = vpop.f32.mrf.mxu0
    %v176 = vadd.f32 0.0, %v175
    %177 = vdwg.mxu0
    %v178 = vand.u32 %v80, 4294901760
    %v179 = vsub.f32 %v80, %v178
    %v180 = vand.u32 %v179, 4294901760
    %v181 = vsub.f32 %v179, %v180
    %v182 = vand.u32 %v181, 4294901760
    %183 = vmatpush.msra.mxu0 %v182
    %v184 = vand.u32 %v79, 4294901760
    %v185 = vsub.f32 %v79, %v184
    %v186 = vand.u32 %v185, 4294901760
    %v187 = vsub.f32 %v185, %v186
    %v188 = vand.u32 %v187, 4294901760
    %189 = vmatpush.msra.mxu0 %v188
    %v190 = vand.u32 %v78, 4294901760
    %v191 = vsub.f32 %v78, %v190
    %v192 = vand.u32 %v191, 4294901760
    %v193 = vsub.f32 %v191, %v192
    %v194 = vand.u32 %v193, 4294901760
    %195 = vmatpush.msra.mxu0 %v194
    %v196 = vand.u32 %v77, 4294901760
    %v197 = vsub.f32 %v77, %v196
    %v198 = vand.u32 %v197, 4294901760
    %v199 = vsub.f32 %v197, %v198
    %v200 = vand.u32 %v199, 4294901760
    %201 = vmatpush.msra.mxu0 %v200
    %v202 = vand.u32 %v76, 4294901760
    %v203 = vsub.f32 %v76, %v202
    %v204 = vand.u32 %v203, 4294901760
    %v205 = vsub.f32 %v203, %v204
    %v206 = vand.u32 %v205, 4294901760
    %207 = vmatpush.msra.mxu0 %v206
    %v208 = vand.u32 %v75, 4294901760
    %v209 = vsub.f32 %v75, %v208
    %v210 = vand.u32 %v209, 4294901760
    %v211 = vsub.f32 %v209, %v210
    %v212 = vand.u32 %v211, 4294901760
    %213 = vmatpush.msra.mxu0 %v212
    %v214 = vand.u32 %v74, 4294901760
    %v215 = vsub.f32 %v74, %v214
    %v216 = vand.u32 %v215, 4294901760
    %v217 = vsub.f32 %v215, %v216
    %v218 = vand.u32 %v217, 4294901760
    %219 = vmatpush.msra.mxu0 %v218
    %v220 = vand.u32 %v73, 4294901760
    %v221 = vsub.f32 %v73, %v220
    %v222 = vand.u32 %v221, 4294901760
    %v223 = vsub.f32 %v221, %v222
    %v224 = vand.u32 %v223, 4294901760
    %225 = vmatpush.msra.mxu0 %v224
    %v226 = vand.u32 %v72, 4294901760
    %v227 = vsub.f32 %v72, %v226
    %v228 = vand.u32 %v227, 4294901760
    %v229 = vsub.f32 %v227, %v228
    %v230 = vand.u32 %v229, 4294901760
    %231 = vmatpush.msra.mxu0 %v230
    %v232 = vand.u32 %v71, 4294901760
    %v233 = vsub.f32 %v71, %v232
    %v234 = vand.u32 %v233, 4294901760
    %v235 = vsub.f32 %v233, %v234
    %v236 = vand.u32 %v235, 4294901760
    %237 = vmatpush.msra.mxu0 %v236
    %v238 = vand.u32 %v70, 4294901760
    %v239 = vsub.f32 %v70, %v238
    %v240 = vand.u32 %v239, 4294901760
    %v241 = vsub.f32 %v239, %v240
    %v242 = vand.u32 %v241, 4294901760
    %243 = vmatpush.msra.mxu0 %v242
    %v244 = vand.u32 %v69, 4294901760
    %v245 = vsub.f32 %v69, %v244
    %v246 = vand.u32 %v245, 4294901760
    %v247 = vsub.f32 %v245, %v246
    %v248 = vand.u32 %v247, 4294901760
    %249 = vmatpush.msra.mxu0 %v248
    %v250 = vand.u32 %v68, 4294901760
    %v251 = vsub.f32 %v68, %v250
    %v252 = vand.u32 %v251, 4294901760
    %v253 = vsub.f32 %v251, %v252
    %v254 = vand.u32 %v253, 4294901760
    %255 = vmatpush.msra.mxu0 %v254
    %v256 = vand.u32 %v67, 4294901760
    %v257 = vsub.f32 %v67, %v256
    %v258 = vand.u32 %v257, 4294901760
    %v259 = vsub.f32 %v257, %v258
    %v260 = vand.u32 %v259, 4294901760
    %261 = vmatpush.msra.mxu0 %v260
    %v262 = vand.u32 %v66, 4294901760
    %v263 = vsub.f32 %v66, %v262
    %v264 = vand.u32 %v263, 4294901760
    %v265 = vsub.f32 %v263, %v264
    %v266 = vand.u32 %v265, 4294901760
    %267 = vmatpush.msra.mxu0 %v266
    %v268 = vand.u32 %v65, 4294901760
    %v269 = vsub.f32 %v65, %v268
    %v270 = vand.u32 %v269, 4294901760
    %v271 = vsub.f32 %v269, %v270
    %v272 = vand.u32 %v271, 4294901760
    %273 = vmatpush.msra.mxu0 %v272
    %v274 = vand.u32 %v57, 4294901760
    %275 = vmatmul.f32.gmra.mxu0 %v274
    %v276 = vpop.f32.mrf.mxu0
    %v277 = vadd.f32 %v168, %v276
    %v278 = vand.u32 %v61, 4294901760
    %279 = vmatmul.f32.gmra.mxu0 %v278
    %v280 = vpop.f32.mrf.mxu0
    %v281 = vadd.f32 %v176, %v280
    %282 = vdwg.mxu0
    %v283 = vand.u32 %v80, 4294901760
    %v284 = vsub.f32 %v80, %v283
    %285 = vmatpush.msra.mxu0 %v284
    %v286 = vand.u32 %v79, 4294901760
    %v287 = vsub.f32 %v79, %v286
    %288 = vmatpush.msra.mxu0 %v287
    %v289 = vand.u32 %v78, 4294901760
    %v290 = vsub.f32 %v78, %v289
    %291 = vmatpush.msra.mxu0 %v290
    %v292 = vand.u32 %v77, 4294901760
    %v293 = vsub.f32 %v77, %v292
    %294 = vmatpush.msra.mxu0 %v293
    %v295 = vand.u32 %v76, 4294901760
    %v296 = vsub.f32 %v76, %v295
    %297 = vmatpush.msra.mxu0 %v296
    %v298 = vand.u32 %v75, 4294901760
    %v299 = vsub.f32 %v75, %v298
    %300 = vmatpush.msra.mxu0 %v299
    %v301 = vand.u32 %v74, 4294901760
    %v302 = vsub.f32 %v74, %v301
    %303 = vmatpush.msra.mxu0 %v302
    %v304 = vand.u32 %v73, 4294901760
    %v305 = vsub.f32 %v73, %v304
    %306 = vmatpush.msra.mxu0 %v305
    %v307 = vand.u32 %v72, 4294901760
    %v308 = vsub.f32 %v72, %v307
    %309 = vmatpush.msra.mxu0 %v308
    %v310 = vand.u32 %v71, 4294901760
    %v311 = vsub.f32 %v71, %v310
    %312 = vmatpush.msra.mxu0 %v311
    %v313 = vand.u32 %v70, 4294901760
    %v314 = vsub.f32 %v70, %v313
    %315 = vmatpush.msra.mxu0 %v314
    %v316 = vand.u32 %v69, 4294901760
    %v317 = vsub.f32 %v69, %v316
    %318 = vmatpush.msra.mxu0 %v317
    %v319 = vand.u32 %v68, 4294901760
    %v320 = vsub.f32 %v68, %v319
    %321 = vmatpush.msra.mxu0 %v320
    %v322 = vand.u32 %v67, 4294901760
    %v323 = vsub.f32 %v67, %v322
    %324 = vmatpush.msra.mxu0 %v323
    %v325 = vand.u32 %v66, 4294901760
    %v326 = vsub.f32 %v66, %v325
    %327 = vmatpush.msra.mxu0 %v326
    %v328 = vand.u32 %v65, 4294901760
    %v329 = vsub.f32 %v65, %v328
    %330 = vmatpush.msra.mxu0 %v329
    %v331 = vand.u32 %v57, 4294901760
    %v332 = vsub.f32 %v57, %v331
    %333 = vmatmul.f32.gmra.mxu0 %v332
    %v334 = vpop.f32.mrf.mxu0
    %v335 = vadd.f32 %v277, %v334
    %v336 = vand.u32 %v61, 4294901760
    %v337 = vsub.f32 %v61, %v336
    %338 = vmatmul.f32.gmra.mxu0 %v337
    %v339 = vpop.f32.mrf.mxu0
    %v340 = vadd.f32 %v281, %v339
    %341 = vdwg.mxu0
    %v342 = vand.u32 %v80, 4294901760
    %343 = vmatpush.msra.mxu0 %v342
    %v344 = vand.u32 %v79, 4294901760
    %345 = vmatpush.msra.mxu0 %v344
    %v346 = vand.u32 %v78, 4294901760
    %347 = vmatpush.msra.mxu0 %v346
    %v348 = vand.u32 %v77, 4294901760
    %349 = vmatpush.msra.mxu0 %v348
    %v350 = vand.u32 %v76, 4294901760
    %351 = vmatpush.msra.mxu0 %v350
    %v352 = vand.u32 %v75, 4294901760
    %353 = vmatpush.msra.mxu0 %v352
    %v354 = vand.u32 %v74, 4294901760
    %355 = vmatpush.msra.mxu0 %v354
    %v356 = vand.u32 %v73, 4294901760
    %357 = vmatpush.msra.mxu0 %v356
    %v358 = vand.u32 %v72, 4294901760
    %359 = vmatpush.msra.mxu0 %v358
    %v360 = vand.u32 %v71, 4294901760
    %361 = vmatpush.msra.mxu0 %v360
    %v362 = vand.u32 %v70, 4294901760
    %363 = vmatpush.msra.mxu0 %v362
    %v364 = vand.u32 %v69, 4294901760
    %365 = vmatpush.msra.mxu0 %v364
    %v366 = vand.u32 %v68, 4294901760
    %367 = vmatpush.msra.mxu0 %v366
    %v368 = vand.u32 %v67, 4294901760
    %369 = vmatpush.msra.mxu0 %v368
    %v370 = vand.u32 %v66, 4294901760
    %371 = vmatpush.msra.mxu0 %v370
    %v372 = vand.u32 %v65, 4294901760
    %373 = vmatpush.msra.mxu0 %v372
    %v374 = vand.u32 %v57, 4294901760
    %v375 = vsub.f32 %v57, %v374
    %v376 = vand.u32 %v375, 4294901760
    %377 = vmatmul.f32.gmra.mxu0 %v376
    %v378 = vpop.f32.mrf.mxu0
    %v379 = vadd.f32 %v335, %v378
    %v380 = vand.u32 %v61, 4294901760
    %v381 = vsub.f32 %v61, %v380
    %v382 = vand.u32 %v381, 4294901760
    %383 = vmatmul.f32.gmra.mxu0 %v382
    %v384 = vpop.f32.mrf.mxu0
    %v385 = vadd.f32 %v340, %v384
    %386 = vdwg.mxu0
    %v387 = vand.u32 %v80, 4294901760
    %v388 = vsub.f32 %v80, %v387
    %v389 = vand.u32 %v388, 4294901760
    %390 = vmatpush.msra.mxu0 %v389
    %v391 = vand.u32 %v79, 4294901760
    %v392 = vsub.f32 %v79, %v391
    %v393 = vand.u32 %v392, 4294901760
    %394 = vmatpush.msra.mxu0 %v393
    %v395 = vand.u32 %v78, 4294901760
    %v396 = vsub.f32 %v78, %v395
    %v397 = vand.u32 %v396, 4294901760
    %398 = vmatpush.msra.mxu0 %v397
    %v399 = vand.u32 %v77, 4294901760
    %v400 = vsub.f32 %v77, %v399
    %v401 = vand.u32 %v400, 4294901760
    %402 = vmatpush.msra.mxu0 %v401
    %v403 = vand.u32 %v76, 4294901760
    %v404 = vsub.f32 %v76, %v403
    %v405 = vand.u32 %v404, 4294901760
    %406 = vmatpush.msra.mxu0 %v405
    %v407 = vand.u32 %v75, 4294901760
    %v408 = vsub.f32 %v75, %v407
    %v409 = vand.u32 %v408, 4294901760
    %410 = vmatpush.msra.mxu0 %v409
    %v411 = vand.u32 %v74, 4294901760
    %v412 = vsub.f32 %v74, %v411
    %v413 = vand.u32 %v412, 4294901760
    %414 = vmatpush.msra.mxu0 %v413
    %v415 = vand.u32 %v73, 4294901760
    %v416 = vsub.f32 %v73, %v415
    %v417 = vand.u32 %v416, 4294901760
    %418 = vmatpush.msra.mxu0 %v417
    %v419 = vand.u32 %v72, 4294901760
    %v420 = vsub.f32 %v72, %v419
    %v421 = vand.u32 %v420, 4294901760
    %422 = vmatpush.msra.mxu0 %v421
    %v423 = vand.u32 %v71, 4294901760
    %v424 = vsub.f32 %v71, %v423
    %v425 = vand.u32 %v424, 4294901760
    %426 = vmatpush.msra.mxu0 %v425
    %v427 = vand.u32 %v70, 4294901760
    %v428 = vsub.f32 %v70, %v427
    %v429 = vand.u32 %v428, 4294901760
    %430 = vmatpush.msra.mxu0 %v429
    %v431 = vand.u32 %v69, 4294901760
    %v432 = vsub.f32 %v69, %v431
    %v433 = vand.u32 %v432, 4294901760
    %434 = vmatpush.msra.mxu0 %v433
    %v435 = vand.u32 %v68, 4294901760
    %v436 = vsub.f32 %v68, %v435
    %v437 = vand.u32 %v436, 4294901760
    %438 = vmatpush.msra.mxu0 %v437
    %v439 = vand.u32 %v67, 4294901760
    %v440 = vsub.f32 %v67, %v439
    %v441 = vand.u32 %v440, 4294901760
    %442 = vmatpush.msra.mxu0 %v441
    %v443 = vand.u32 %v66, 4294901760
    %v444 = vsub.f32 %v66, %v443
    %v445 = vand.u32 %v444, 4294901760
    %446 = vmatpush.msra.mxu0 %v445
    %v447 = vand.u32 %v65, 4294901760
    %v448 = vsub.f32 %v65, %v447
    %v449 = vand.u32 %v448, 4294901760
    %450 = vmatpush.msra.mxu0 %v449
    %v451 = vand.u32 %v57, 4294901760
    %452 = vmatmul.f32.gmra.mxu0 %v451
    %v453 = vpop.f32.mrf.mxu0
    %v454 = vadd.f32 %v379, %v453
    %v455 = vand.u32 %v61, 4294901760
    %456 = vmatmul.f32.gmra.mxu0 %v455
    %v457 = vpop.f32.mrf.mxu0
    %v458 = vadd.f32 %v385, %v457
    %459 = vdwg.mxu0
    %v460 = vand.u32 %v80, 4294901760
    %461 = vmatpush.msra.mxu0 %v460
    %v462 = vand.u32 %v79, 4294901760
    %463 = vmatpush.msra.mxu0 %v462
    %v464 = vand.u32 %v78, 4294901760
    %465 = vmatpush.msra.mxu0 %v464
    %v466 = vand.u32 %v77, 4294901760
    %467 = vmatpush.msra.mxu0 %v466
    %v468 = vand.u32 %v76, 4294901760
    %469 = vmatpush.msra.mxu0 %v468
    %v470 = vand.u32 %v75, 4294901760
    %471 = vmatpush.msra.mxu0 %v470
    %v472 = vand.u32 %v74, 4294901760
    %473 = vmatpush.msra.mxu0 %v472
    %v474 = vand.u32 %v73, 4294901760
    %475 = vmatpush.msra.mxu0 %v474
    %v476 = vand.u32 %v72, 4294901760
    %477 = vmatpush.msra.mxu0 %v476
    %v478 = vand.u32 %v71, 4294901760
    %479 = vmatpush.msra.mxu0 %v478
    %v480 = vand.u32 %v70, 4294901760
    %481 = vmatpush.msra.mxu0 %v480
    %v482 = vand.u32 %v69, 4294901760
    %483 = vmatpush.msra.mxu0 %v482
    %v484 = vand.u32 %v68, 4294901760
    %485 = vmatpush.msra.mxu0 %v484
    %v486 = vand.u32 %v67, 4294901760
    %487 = vmatpush.msra.mxu0 %v486
    %v488 = vand.u32 %v66, 4294901760
    %489 = vmatpush.msra.mxu0 %v488
    %v490 = vand.u32 %v65, 4294901760
    %491 = vmatpush.msra.mxu0 %v490
    %v492 = vand.u32 %v57, 4294901760
    %493 = vmatmul.f32.gmra.mxu0 %v492
    %v494 = vpop.f32.mrf.mxu0
    %v495 = vadd.f32 %v454, %v494
    %v496 = vand.u32 %v61, 4294901760
    %497 = vmatmul.f32.gmra.mxu0 %v496
    %v498 = vpop.f32.mrf.mxu0
    %v499 = vadd.f32 %v458, %v498
    %500 = vdwg.mxu0
    %v501 = vand.u32 %v96, 4294901760
    %502 = vmatpush.msra.mxu0 %v501
    %v503 = vand.u32 %v95, 4294901760
    %504 = vmatpush.msra.mxu0 %v503
    %v505 = vand.u32 %v94, 4294901760
    %506 = vmatpush.msra.mxu0 %v505
    %v507 = vand.u32 %v93, 4294901760
    %508 = vmatpush.msra.mxu0 %v507
    %v509 = vand.u32 %v92, 4294901760
    %510 = vmatpush.msra.mxu0 %v509
    %v511 = vand.u32 %v91, 4294901760
    %512 = vmatpush.msra.mxu0 %v511
    %v513 = vand.u32 %v90, 4294901760
    %514 = vmatpush.msra.mxu0 %v513
    %v515 = vand.u32 %v89, 4294901760
    %516 = vmatpush.msra.mxu0 %v515
    %v517 = vand.u32 %v88, 4294901760
    %518 = vmatpush.msra.mxu0 %v517
    %v519 = vand.u32 %v87, 4294901760
    %520 = vmatpush.msra.mxu0 %v519
    %v521 = vand.u32 %v86, 4294901760
    %522 = vmatpush.msra.mxu0 %v521
    %v523 = vand.u32 %v85, 4294901760
    %524 = vmatpush.msra.mxu0 %v523
    %v525 = vand.u32 %v84, 4294901760
    %526 = vmatpush.msra.mxu0 %v525
    %v527 = vand.u32 %v83, 4294901760
    %528 = vmatpush.msra.mxu0 %v527
    %v529 = vand.u32 %v82, 4294901760
    %530 = vmatpush.msra.mxu0 %v529
    %v531 = vand.u32 %v81, 4294901760
    %532 = vmatpush.msra.mxu0 %v531
    %v533 = vand.u32 %v58, 4294901760
    %v534 = vsub.f32 %v58, %v533
    %v535 = vand.u32 %v534, 4294901760
    %v536 = vsub.f32 %v534, %v535
    %v537 = vand.u32 %v536, 4294901760
    %538 = vmatmul.f32.gmra.mxu0 %v537
    %v539 = vpop.f32.mrf.mxu0
    %v540 = vadd.f32 %v495, %v539
    %v541 = vand.u32 %v62, 4294901760
    %v542 = vsub.f32 %v62, %v541
    %v543 = vand.u32 %v542, 4294901760
    %v544 = vsub.f32 %v542, %v543
    %v545 = vand.u32 %v544, 4294901760
    %546 = vmatmul.f32.gmra.mxu0 %v545
    %v547 = vpop.f32.mrf.mxu0
    %v548 = vadd.f32 %v499, %v547
    %549 = vdwg.mxu0
    %v550 = vand.u32 %v96, 4294901760
    %v551 = vsub.f32 %v96, %v550
    %v552 = vand.u32 %v551, 4294901760
    %v553 = vsub.f32 %v551, %v552
    %v554 = vand.u32 %v553, 4294901760
    %555 = vmatpush.msra.mxu0 %v554
    %v556 = vand.u32 %v95, 4294901760
    %v557 = vsub.f32 %v95, %v556
    %v558 = vand.u32 %v557, 4294901760
    %v559 = vsub.f32 %v557, %v558
    %v560 = vand.u32 %v559, 4294901760
    %561 = vmatpush.msra.mxu0 %v560
    %v562 = vand.u32 %v94, 4294901760
    %v563 = vsub.f32 %v94, %v562
    %v564 = vand.u32 %v563, 4294901760
    %v565 = vsub.f32 %v563, %v564
    %v566 = vand.u32 %v565, 4294901760
    %567 = vmatpush.msra.mxu0 %v566
    %v568 = vand.u32 %v93, 4294901760
    %v569 = vsub.f32 %v93, %v568
    %v570 = vand.u32 %v569, 4294901760
    %v571 = vsub.f32 %v569, %v570
    %v572 = vand.u32 %v571, 4294901760
    %573 = vmatpush.msra.mxu0 %v572
    %v574 = vand.u32 %v92, 4294901760
    %v575 = vsub.f32 %v92, %v574
    %v576 = vand.u32 %v575, 4294901760
    %v577 = vsub.f32 %v575, %v576
    %v578 = vand.u32 %v577, 4294901760
    %579 = vmatpush.msra.mxu0 %v578
    %v580 = vand.u32 %v91, 4294901760
    %v581 = vsub.f32 %v91, %v580
    %v582 = vand.u32 %v581, 4294901760
    %v583 = vsub.f32 %v581, %v582
    %v584 = vand.u32 %v583, 4294901760
    %585 = vmatpush.msra.mxu0 %v584
    %v586 = vand.u32 %v90, 4294901760
    %v587 = vsub.f32 %v90, %v586
    %v588 = vand.u32 %v587, 4294901760
    %v589 = vsub.f32 %v587, %v588
    %v590 = vand.u32 %v589, 4294901760
    %591 = vmatpush.msra.mxu0 %v590
    %v592 = vand.u32 %v89, 4294901760
    %v593 = vsub.f32 %v89, %v592
    %v594 = vand.u32 %v593, 4294901760
    %v595 = vsub.f32 %v593, %v594
    %v596 = vand.u32 %v595, 4294901760
    %597 = vmatpush.msra.mxu0 %v596
    %v598 = vand.u32 %v88, 4294901760
    %v599 = vsub.f32 %v88, %v598
    %v600 = vand.u32 %v599, 4294901760
    %v601 = vsub.f32 %v599, %v600
    %v602 = vand.u32 %v601, 4294901760
    %603 = vmatpush.msra.mxu0 %v602
    %v604 = vand.u32 %v87, 4294901760
    %v605 = vsub.f32 %v87, %v604
    %v606 = vand.u32 %v605, 4294901760
    %v607 = vsub.f32 %v605, %v606
    %v608 = vand.u32 %v607, 4294901760
    %609 = vmatpush.msra.mxu0 %v608
    %v610 = vand.u32 %v86, 4294901760
    %v611 = vsub.f32 %v86, %v610
    %v612 = vand.u32 %v611, 4294901760
    %v613 = vsub.f32 %v611, %v612
    %v614 = vand.u32 %v613, 4294901760
    %615 = vmatpush.msra.mxu0 %v614
    %v616 = vand.u32 %v85, 4294901760
    %v617 = vsub.f32 %v85, %v616
    %v618 = vand.u32 %v617, 4294901760
    %v619 = vsub.f32 %v617, %v618
    %v620 = vand.u32 %v619, 4294901760
    %621 = vmatpush.msra.mxu0 %v620
    %v622 = vand.u32 %v84, 4294901760
    %v623 = vsub.f32 %v84, %v622
    %v624 = vand.u32 %v623, 4294901760
    %v625 = vsub.f32 %v623, %v624
    %v626 = vand.u32 %v625, 4294901760
    %627 = vmatpush.msra.mxu0 %v626
    %v628 = vand.u32 %v83, 4294901760
    %v629 = vsub.f32 %v83, %v628
    %v630 = vand.u32 %v629, 4294901760
    %v631 = vsub.f32 %v629, %v630
    %v632 = vand.u32 %v631, 4294901760
    %633 = vmatpush.msra.mxu0 %v632
    %v634 = vand.u32 %v82, 4294901760
    %v635 = vsub.f32 %v82, %v634
    %v636 = vand.u32 %v635, 4294901760
    %v637 = vsub.f32 %v635, %v636
    %v638 = vand.u32 %v637, 4294901760
    %639 = vmatpush.msra.mxu0 %v638
    %v640 = vand.u32 %v81, 4294901760
    %v641 = vsub.f32 %v81, %v640
    %v642 = vand.u32 %v641, 4294901760
    %v643 = vsub.f32 %v641, %v642
    %v644 = vand.u32 %v643, 4294901760
    %645 = vmatpush.msra.mxu0 %v644
    %v646 = vand.u32 %v58, 4294901760
    %647 = vmatmul.f32.gmra.mxu0 %v646
    %v648 = vpop.f32.mrf.mxu0
    %v649 = vadd.f32 %v540, %v648
    %v650 = vand.u32 %v62, 4294901760
    %651 = vmatmul.f32.gmra.mxu0 %v650
    %v652 = vpop.f32.mrf.mxu0
    %v653 = vadd.f32 %v548, %v652
    %654 = vdwg.mxu0
    %v655 = vand.u32 %v96, 4294901760
    %v656 = vsub.f32 %v96, %v655
    %657 = vmatpush.msra.mxu0 %v656
    %v658 = vand.u32 %v95, 4294901760
    %v659 = vsub.f32 %v95, %v658
    %660 = vmatpush.msra.mxu0 %v659
    %v661 = vand.u32 %v94, 4294901760
    %v662 = vsub.f32 %v94, %v661
    %663 = vmatpush.msra.mxu0 %v662
    %v664 = vand.u32 %v93, 4294901760
    %v665 = vsub.f32 %v93, %v664
    %666 = vmatpush.msra.mxu0 %v665
    %v667 = vand.u32 %v92, 4294901760
    %v668 = vsub.f32 %v92, %v667
    %669 = vmatpush.msra.mxu0 %v668
    %v670 = vand.u32 %v91, 4294901760
    %v671 = vsub.f32 %v91, %v670
    %672 = vmatpush.msra.mxu0 %v671
    %v673 = vand.u32 %v90, 4294901760
    %v674 = vsub.f32 %v90, %v673
    %675 = vmatpush.msra.mxu0 %v674
    %v676 = vand.u32 %v89, 4294901760
    %v677 = vsub.f32 %v89, %v676
    %678 = vmatpush.msra.mxu0 %v677
    %v679 = vand.u32 %v88, 4294901760
    %v680 = vsub.f32 %v88, %v679
    %681 = vmatpush.msra.mxu0 %v680
    %v682 = vand.u32 %v87, 4294901760
    %v683 = vsub.f32 %v87, %v682
    %684 = vmatpush.msra.mxu0 %v683
    %v685 = vand.u32 %v86, 4294901760
    %v686 = vsub.f32 %v86, %v685
    %687 = vmatpush.msra.mxu0 %v686
    %v688 = vand.u32 %v85, 4294901760
    %v689 = vsub.f32 %v85, %v688
    %690 = vmatpush.msra.mxu0 %v689
    %v691 = vand.u32 %v84, 4294901760
    %v692 = vsub.f32 %v84, %v691
    %693 = vmatpush.msra.mxu0 %v692
    %v694 = vand.u32 %v83, 4294901760
    %v695 = vsub.f32 %v83, %v694
    %696 = vmatpush.msra.mxu0 %v695
    %v697 = vand.u32 %v82, 4294901760
    %v698 = vsub.f32 %v82, %v697
    %699 = vmatpush.msra.mxu0 %v698
    %v700 = vand.u32 %v81, 4294901760
    %v701 = vsub.f32 %v81, %v700
    %702 = vmatpush.msra.mxu0 %v701
    %v703 = vand.u32 %v58, 4294901760
    %v704 = vsub.f32 %v58, %v703
    %705 = vmatmul.f32.gmra.mxu0 %v704
    %v706 = vpop.f32.mrf.mxu0
    %v707 = vadd.f32 %v649, %v706
    %v708 = vand.u32 %v62, 4294901760
    %v709 = vsub.f32 %v62, %v708
    %710 = vmatmul.f32.gmra.mxu0 %v709
    %v711 = vpop.f32.mrf.mxu0
    %v712 = vadd.f32 %v653, %v711
    %713 = vdwg.mxu0
    %v714 = vand.u32 %v96, 4294901760
    %715 = vmatpush.msra.mxu0 %v714
    %v716 = vand.u32 %v95, 4294901760
    %717 = vmatpush.msra.mxu0 %v716
    %v718 = vand.u32 %v94, 4294901760
    %719 = vmatpush.msra.mxu0 %v718
    %v720 = vand.u32 %v93, 4294901760
    %721 = vmatpush.msra.mxu0 %v720
    %v722 = vand.u32 %v92, 4294901760
    %723 = vmatpush.msra.mxu0 %v722
    %v724 = vand.u32 %v91, 4294901760
    %725 = vmatpush.msra.mxu0 %v724
    %v726 = vand.u32 %v90, 4294901760
    %727 = vmatpush.msra.mxu0 %v726
    %v728 = vand.u32 %v89, 4294901760
    %729 = vmatpush.msra.mxu0 %v728
    %v730 = vand.u32 %v88, 4294901760
    %731 = vmatpush.msra.mxu0 %v730
    %v732 = vand.u32 %v87, 4294901760
    %733 = vmatpush.msra.mxu0 %v732
    %v734 = vand.u32 %v86, 4294901760
    %735 = vmatpush.msra.mxu0 %v734
    %v736 = vand.u32 %v85, 4294901760
    %737 = vmatpush.msra.mxu0 %v736
    %v738 = vand.u32 %v84, 4294901760
    %739 = vmatpush.msra.mxu0 %v738
    %v740 = vand.u32 %v83, 4294901760
    %741 = vmatpush.msra.mxu0 %v740
    %v742 = vand.u32 %v82, 4294901760
    %743 = vmatpush.msra.mxu0 %v742
    %v744 = vand.u32 %v81, 4294901760
    %745 = vmatpush.msra.mxu0 %v744
    %v746 = vand.u32 %v58, 4294901760
    %v747 = vsub.f32 %v58, %v746
    %v748 = vand.u32 %v747, 4294901760
    %749 = vmatmul.f32.gmra.mxu0 %v748
    %v750 = vpop.f32.mrf.mxu0
    %v751 = vadd.f32 %v707, %v750
    %v752 = vand.u32 %v62, 4294901760
    %v753 = vsub.f32 %v62, %v752
    %v754 = vand.u32 %v753, 4294901760
    %755 = vmatmul.f32.gmra.mxu0 %v754
    %v756 = vpop.f32.mrf.mxu0
    %v757 = vadd.f32 %v712, %v756
    %758 = vdwg.mxu0
    %v759 = vand.u32 %v96, 4294901760
    %v760 = vsub.f32 %v96, %v759
    %v761 = vand.u32 %v760, 4294901760
    %762 = vmatpush.msra.mxu0 %v761
    %v763 = vand.u32 %v95, 4294901760
    %v764 = vsub.f32 %v95, %v763
    %v765 = vand.u32 %v764, 4294901760
    %766 = vmatpush.msra.mxu0 %v765
    %v767 = vand.u32 %v94, 4294901760
    %v768 = vsub.f32 %v94, %v767
    %v769 = vand.u32 %v768, 4294901760
    %770 = vmatpush.msra.mxu0 %v769
    %v771 = vand.u32 %v93, 4294901760
    %v772 = vsub.f32 %v93, %v771
    %v773 = vand.u32 %v772, 4294901760
    %774 = vmatpush.msra.mxu0 %v773
    %v775 = vand.u32 %v92, 4294901760
    %v776 = vsub.f32 %v92, %v775
    %v777 = vand.u32 %v776, 4294901760
    %778 = vmatpush.msra.mxu0 %v777
    %v779 = vand.u32 %v91, 4294901760
    %v780 = vsub.f32 %v91, %v779
    %v781 = vand.u32 %v780, 4294901760
    %782 = vmatpush.msra.mxu0 %v781
    %v783 = vand.u32 %v90, 4294901760
    %v784 = vsub.f32 %v90, %v783
    %v785 = vand.u32 %v784, 4294901760
    %786 = vmatpush.msra.mxu0 %v785
    %v787 = vand.u32 %v89, 4294901760
    %v788 = vsub.f32 %v89, %v787
    %v789 = vand.u32 %v788, 4294901760
    %790 = vmatpush.msra.mxu0 %v789
    %v791 = vand.u32 %v88, 4294901760
    %v792 = vsub.f32 %v88, %v791
    %v793 = vand.u32 %v792, 4294901760
    %794 = vmatpush.msra.mxu0 %v793
    %v795 = vand.u32 %v87, 4294901760
    %v796 = vsub.f32 %v87, %v795
    %v797 = vand.u32 %v796, 4294901760
    %798 = vmatpush.msra.mxu0 %v797
    %v799 = vand.u32 %v86, 4294901760
    %v800 = vsub.f32 %v86, %v799
    %v801 = vand.u32 %v800, 4294901760
    %802 = vmatpush.msra.mxu0 %v801
    %v803 = vand.u32 %v85, 4294901760
    %v804 = vsub.f32 %v85, %v803
    %v805 = vand.u32 %v804, 4294901760
    %806 = vmatpush.msra.mxu0 %v805
    %v807 = vand.u32 %v84, 4294901760
    %v808 = vsub.f32 %v84, %v807
    %v809 = vand.u32 %v808, 4294901760
    %810 = vmatpush.msra.mxu0 %v809
    %v811 = vand.u32 %v83, 4294901760
    %v812 = vsub.f32 %v83, %v811
    %v813 = vand.u32 %v812, 4294901760
    %814 = vmatpush.msra.mxu0 %v813
    %v815 = vand.u32 %v82, 4294901760
    %v816 = vsub.f32 %v82, %v815
    %v817 = vand.u32 %v816, 4294901760
    %818 = vmatpush.msra.mxu0 %v817
    %v819 = vand.u32 %v81, 4294901760
    %v820 = vsub.f32 %v81, %v819
    %v821 = vand.u32 %v820, 4294901760
    %822 = vmatpush.msra.mxu0 %v821
    %v823 = vand.u32 %v58, 4294901760
    %824 = vmatmul.f32.gmra.mxu0 %v823
    %v825 = vpop.f32.mrf.mxu0
    %v826 = vadd.f32 %v751, %v825
    %v827 = vand.u32 %v62, 4294901760
    %828 = vmatmul.f32.gmra.mxu0 %v827
    %v829 = vpop.f32.mrf.mxu0
    %v830 = vadd.f32 %v757, %v829
    %831 = vdwg.mxu0
    %v832 = vand.u32 %v96, 4294901760
    %833 = vmatpush.msra.mxu0 %v832
    %v834 = vand.u32 %v95, 4294901760
    %835 = vmatpush.msra.mxu0 %v834
    %v836 = vand.u32 %v94, 4294901760
    %837 = vmatpush.msra.mxu0 %v836
    %v838 = vand.u32 %v93, 4294901760
    %839 = vmatpush.msra.mxu0 %v838
    %v840 = vand.u32 %v92, 4294901760
    %841 = vmatpush.msra.mxu0 %v840
    %v842 = vand.u32 %v91, 4294901760
    %843 = vmatpush.msra.mxu0 %v842
    %v844 = vand.u32 %v90, 4294901760
    %845 = vmatpush.msra.mxu0 %v844
    %v846 = vand.u32 %v89, 4294901760
    %847 = vmatpush.msra.mxu0 %v846
    %v848 = vand.u32 %v88, 4294901760
    %849 = vmatpush.msra.mxu0 %v848
    %v850 = vand.u32 %v87, 4294901760
    %851 = vmatpush.msra.mxu0 %v850
    %v852 = vand.u32 %v86, 4294901760
    %853 = vmatpush.msra.mxu0 %v852
    %v854 = vand.u32 %v85, 4294901760
    %855 = vmatpush.msra.mxu0 %v854
    %v856 = vand.u32 %v84, 4294901760
    %857 = vmatpush.msra.mxu0 %v856
    %v858 = vand.u32 %v83, 4294901760
    %859 = vmatpush.msra.mxu0 %v858
    %v860 = vand.u32 %v82, 4294901760
    %861 = vmatpush.msra.mxu0 %v860
    %v862 = vand.u32 %v81, 4294901760
    %863 = vmatpush.msra.mxu0 %v862
    %v864 = vand.u32 %v58, 4294901760
    %865 = vmatmul.f32.gmra.mxu0 %v864
    %v866 = vpop.f32.mrf.mxu0
    %v867 = vadd.f32 %v826, %v866
    %v868 = vand.u32 %v62, 4294901760
    %869 = vmatmul.f32.gmra.mxu0 %v868
    %v870 = vpop.f32.mrf.mxu0
    %v871 = vadd.f32 %v830, %v870
    %872 = vdwg.mxu0
    %v873 = vand.u32 %v112, 4294901760
    %874 = vmatpush.msra.mxu0 %v873
    %v875 = vand.u32 %v111, 4294901760
    %876 = vmatpush.msra.mxu0 %v875
    %v877 = vand.u32 %v110, 4294901760
    %878 = vmatpush.msra.mxu0 %v877
    %v879 = vand.u32 %v109, 4294901760
    %880 = vmatpush.msra.mxu0 %v879
    %v881 = vand.u32 %v108, 4294901760
    %882 = vmatpush.msra.mxu0 %v881
    %v883 = vand.u32 %v107, 4294901760
    %884 = vmatpush.msra.mxu0 %v883
    %v885 = vand.u32 %v106, 4294901760
    %886 = vmatpush.msra.mxu0 %v885
    %v887 = vand.u32 %v105, 4294901760
    %888 = vmatpush.msra.mxu0 %v887
    %v889 = vand.u32 %v104, 4294901760
    %890 = vmatpush.msra.mxu0 %v889
    %v891 = vand.u32 %v103, 4294901760
    %892 = vmatpush.msra.mxu0 %v891
    %v893 = vand.u32 %v102, 4294901760
    %894 = vmatpush.msra.mxu0 %v893
    %v895 = vand.u32 %v101, 4294901760
    %896 = vmatpush.msra.mxu0 %v895
    %v897 = vand.u32 %v100, 4294901760
    %898 = vmatpush.msra.mxu0 %v897
    %v899 = vand.u32 %v99, 4294901760
    %900 = vmatpush.msra.mxu0 %v899
    %v901 = vand.u32 %v98, 4294901760
    %902 = vmatpush.msra.mxu0 %v901
    %v903 = vand.u32 %v97, 4294901760
    %904 = vmatpush.msra.mxu0 %v903
    %v905 = vand.u32 %v59, 4294901760
    %v906 = vsub.f32 %v59, %v905
    %v907 = vand.u32 %v906, 4294901760
    %v908 = vsub.f32 %v906, %v907
    %v909 = vand.u32 %v908, 4294901760
    %910 = vmatmul.f32.gmra.mxu0 %v909
    %v911 = vpop.f32.mrf.mxu0
    %v912 = vadd.f32 %v867, %v911
    %v913 = vand.u32 %v63, 4294901760
    %v914 = vsub.f32 %v63, %v913
    %v915 = vand.u32 %v914, 4294901760
    %v916 = vsub.f32 %v914, %v915
    %v917 = vand.u32 %v916, 4294901760
    %918 = vmatmul.f32.gmra.mxu0 %v917
    %v919 = vpop.f32.mrf.mxu0
    %v920 = vadd.f32 %v871, %v919
    %921 = vdwg.mxu0
    %v922 = vand.u32 %v112, 4294901760
    %v923 = vsub.f32 %v112, %v922
    %v924 = vand.u32 %v923, 4294901760
    %v925 = vsub.f32 %v923, %v924
    %v926 = vand.u32 %v925, 4294901760
    %927 = vmatpush.msra.mxu0 %v926
    %v928 = vand.u32 %v111, 4294901760
    %v929 = vsub.f32 %v111, %v928
    %v930 = vand.u32 %v929, 4294901760
    %v931 = vsub.f32 %v929, %v930
    %v932 = vand.u32 %v931, 4294901760
    %933 = vmatpush.msra.mxu0 %v932
    %v934 = vand.u32 %v110, 4294901760
    %v935 = vsub.f32 %v110, %v934
    %v936 = vand.u32 %v935, 4294901760
    %v937 = vsub.f32 %v935, %v936
    %v938 = vand.u32 %v937, 4294901760
    %939 = vmatpush.msra.mxu0 %v938
    %v940 = vand.u32 %v109, 4294901760
    %v941 = vsub.f32 %v109, %v940
    %v942 = vand.u32 %v941, 4294901760
    %v943 = vsub.f32 %v941, %v942
    %v944 = vand.u32 %v943, 4294901760
    %945 = vmatpush.msra.mxu0 %v944
    %v946 = vand.u32 %v108, 4294901760
    %v947 = vsub.f32 %v108, %v946
    %v948 = vand.u32 %v947, 4294901760
    %v949 = vsub.f32 %v947, %v948
    %v950 = vand.u32 %v949, 4294901760
    %951 = vmatpush.msra.mxu0 %v950
    %v952 = vand.u32 %v107, 4294901760
    %v953 = vsub.f32 %v107, %v952
    %v954 = vand.u32 %v953, 4294901760
    %v955 = vsub.f32 %v953, %v954
    %v956 = vand.u32 %v955, 4294901760
    %957 = vmatpush.msra.mxu0 %v956
    %v958 = vand.u32 %v106, 4294901760
    %v959 = vsub.f32 %v106, %v958
    %v960 = vand.u32 %v959, 4294901760
    %v961 = vsub.f32 %v959, %v960
    %v962 = vand.u32 %v961, 4294901760
    %963 = vmatpush.msra.mxu0 %v962
    %v964 = vand.u32 %v105, 4294901760
    %v965 = vsub.f32 %v105, %v964
    %v966 = vand.u32 %v965, 4294901760
    %v967 = vsub.f32 %v965, %v966
    %v968 = vand.u32 %v967, 4294901760
    %969 = vmatpush.msra.mxu0 %v968
    %v970 = vand.u32 %v104, 4294901760
    %v971 = vsub.f32 %v104, %v970
    %v972 = vand.u32 %v971, 4294901760
    %v973 = vsub.f32 %v971, %v972
    %v974 = vand.u32 %v973, 4294901760
    %975 = vmatpush.msra.mxu0 %v974
    %v976 = vand.u32 %v103, 4294901760
    %v977 = vsub.f32 %v103, %v976
    %v978 = vand.u32 %v977, 4294901760
    %v979 = vsub.f32 %v977, %v978
    %v980 = vand.u32 %v979, 4294901760
    %981 = vmatpush.msra.mxu0 %v980
    %v982 = vand.u32 %v102, 4294901760
    %v983 = vsub.f32 %v102, %v982
    %v984 = vand.u32 %v983, 4294901760
    %v985 = vsub.f32 %v983, %v984
    %v986 = vand.u32 %v985, 4294901760
    %987 = vmatpush.msra.mxu0 %v986
    %v988 = vand.u32 %v101, 4294901760
    %v989 = vsub.f32 %v101, %v988
    %v990 = vand.u32 %v989, 4294901760
    %v991 = vsub.f32 %v989, %v990
    %v992 = vand.u32 %v991, 4294901760
    %993 = vmatpush.msra.mxu0 %v992
    %v994 = vand.u32 %v100, 4294901760
    %v995 = vsub.f32 %v100, %v994
    %v996 = vand.u32 %v995, 4294901760
    %v997 = vsub.f32 %v995, %v996
    %v998 = vand.u32 %v997, 4294901760
    %999 = vmatpush.msra.mxu0 %v998
    %v1000 = vand.u32 %v99, 4294901760
    %v1001 = vsub.f32 %v99, %v1000
    %v1002 = vand.u32 %v1001, 4294901760
    %v1003 = vsub.f32 %v1001, %v1002
    %v1004 = vand.u32 %v1003, 4294901760
    %1005 = vmatpush.msra.mxu0 %v1004
    %v1006 = vand.u32 %v98, 4294901760
    %v1007 = vsub.f32 %v98, %v1006
    %v1008 = vand.u32 %v1007, 4294901760
    %v1009 = vsub.f32 %v1007, %v1008
    %v1010 = vand.u32 %v1009, 4294901760
    %1011 = vmatpush.msra.mxu0 %v1010
    %v1012 = vand.u32 %v97, 4294901760
    %v1013 = vsub.f32 %v97, %v1012
    %v1014 = vand.u32 %v1013, 4294901760
    %v1015 = vsub.f32 %v1013, %v1014
    %v1016 = vand.u32 %v1015, 4294901760
    %1017 = vmatpush.msra.mxu0 %v1016
    %v1018 = vand.u32 %v59, 4294901760
    %1019 = vmatmul.f32.gmra.mxu0 %v1018
    %v1020 = vpop.f32.mrf.mxu0
    %v1021 = vadd.f32 %v912, %v1020
    %v1022 = vand.u32 %v63, 4294901760
    %1023 = vmatmul.f32.gmra.mxu0 %v1022
    %v1024 = vpop.f32.mrf.mxu0
    %v1025 = vadd.f32 %v920, %v1024
    %1026 = vdwg.mxu0
    %v1027 = vand.u32 %v112, 4294901760
    %v1028 = vsub.f32 %v112, %v1027
    %1029 = vmatpush.msra.mxu0 %v1028
    %v1030 = vand.u32 %v111, 4294901760
    %v1031 = vsub.f32 %v111, %v1030
    %1032 = vmatpush.msra.mxu0 %v1031
    %v1033 = vand.u32 %v110, 4294901760
    %v1034 = vsub.f32 %v110, %v1033
    %1035 = vmatpush.msra.mxu0 %v1034
    %v1036 = vand.u32 %v109, 4294901760
    %v1037 = vsub.f32 %v109, %v1036
    %1038 = vmatpush.msra.mxu0 %v1037
    %v1039 = vand.u32 %v108, 4294901760
    %v1040 = vsub.f32 %v108, %v1039
    %1041 = vmatpush.msra.mxu0 %v1040
    %v1042 = vand.u32 %v107, 4294901760
    %v1043 = vsub.f32 %v107, %v1042
    %1044 = vmatpush.msra.mxu0 %v1043
    %v1045 = vand.u32 %v106, 4294901760
    %v1046 = vsub.f32 %v106, %v1045
    %1047 = vmatpush.msra.mxu0 %v1046
    %v1048 = vand.u32 %v105, 4294901760
    %v1049 = vsub.f32 %v105, %v1048
    %1050 = vmatpush.msra.mxu0 %v1049
    %v1051 = vand.u32 %v104, 4294901760
    %v1052 = vsub.f32 %v104, %v1051
    %1053 = vmatpush.msra.mxu0 %v1052
    %v1054 = vand.u32 %v103, 4294901760
    %v1055 = vsub.f32 %v103, %v1054
    %1056 = vmatpush.msra.mxu0 %v1055
    %v1057 = vand.u32 %v102, 4294901760
    %v1058 = vsub.f32 %v102, %v1057
    %1059 = vmatpush.msra.mxu0 %v1058
    %v1060 = vand.u32 %v101, 4294901760
    %v1061 = vsub.f32 %v101, %v1060
    %1062 = vmatpush.msra.mxu0 %v1061
    %v1063 = vand.u32 %v100, 4294901760
    %v1064 = vsub.f32 %v100, %v1063
    %1065 = vmatpush.msra.mxu0 %v1064
    %v1066 = vand.u32 %v99, 4294901760
    %v1067 = vsub.f32 %v99, %v1066
    %1068 = vmatpush.msra.mxu0 %v1067
    %v1069 = vand.u32 %v98, 4294901760
    %v1070 = vsub.f32 %v98, %v1069
    %1071 = vmatpush.msra.mxu0 %v1070
    %v1072 = vand.u32 %v97, 4294901760
    %v1073 = vsub.f32 %v97, %v1072
    %1074 = vmatpush.msra.mxu0 %v1073
    %v1075 = vand.u32 %v59, 4294901760
    %v1076 = vsub.f32 %v59, %v1075
    %1077 = vmatmul.f32.gmra.mxu0 %v1076
    %v1078 = vpop.f32.mrf.mxu0
    %v1079 = vadd.f32 %v1021, %v1078
    %v1080 = vand.u32 %v63, 4294901760
    %v1081 = vsub.f32 %v63, %v1080
    %1082 = vmatmul.f32.gmra.mxu0 %v1081
    %v1083 = vpop.f32.mrf.mxu0
    %v1084 = vadd.f32 %v1025, %v1083
    %1085 = vdwg.mxu0
    %v1086 = vand.u32 %v112, 4294901760
    %1087 = vmatpush.msra.mxu0 %v1086
    %v1088 = vand.u32 %v111, 4294901760
    %1089 = vmatpush.msra.mxu0 %v1088
    %v1090 = vand.u32 %v110, 4294901760
    %1091 = vmatpush.msra.mxu0 %v1090
    %v1092 = vand.u32 %v109, 4294901760
    %1093 = vmatpush.msra.mxu0 %v1092
    %v1094 = vand.u32 %v108, 4294901760
    %1095 = vmatpush.msra.mxu0 %v1094
    %v1096 = vand.u32 %v107, 4294901760
    %1097 = vmatpush.msra.mxu0 %v1096
    %v1098 = vand.u32 %v106, 4294901760
    %1099 = vmatpush.msra.mxu0 %v1098
    %v1100 = vand.u32 %v105, 4294901760
    %1101 = vmatpush.msra.mxu0 %v1100
    %v1102 = vand.u32 %v104, 4294901760
    %1103 = vmatpush.msra.mxu0 %v1102
    %v1104 = vand.u32 %v103, 4294901760
    %1105 = vmatpush.msra.mxu0 %v1104
    %v1106 = vand.u32 %v102, 4294901760
    %1107 = vmatpush.msra.mxu0 %v1106
    %v1108 = vand.u32 %v101, 4294901760
    %1109 = vmatpush.msra.mxu0 %v1108
    %v1110 = vand.u32 %v100, 4294901760
    %1111 = vmatpush.msra.mxu0 %v1110
    %v1112 = vand.u32 %v99, 4294901760
    %1113 = vmatpush.msra.mxu0 %v1112
    %v1114 = vand.u32 %v98, 4294901760
    %1115 = vmatpush.msra.mxu0 %v1114
    %v1116 = vand.u32 %v97, 4294901760
    %1117 = vmatpush.msra.mxu0 %v1116
    %v1118 = vand.u32 %v59, 4294901760
    %v1119 = vsub.f32 %v59, %v1118
    %v1120 = vand.u32 %v1119, 4294901760
    %1121 = vmatmul.f32.gmra.mxu0 %v1120
    %v1122 = vpop.f32.mrf.mxu0
    %v1123 = vadd.f32 %v1079, %v1122
    %v1124 = vand.u32 %v63, 4294901760
    %v1125 = vsub.f32 %v63, %v1124
    %v1126 = vand.u32 %v1125, 4294901760
    %1127 = vmatmul.f32.gmra.mxu0 %v1126
    %v1128 = vpop.f32.mrf.mxu0
    %v1129 = vadd.f32 %v1084, %v1128
    %1130 = vdwg.mxu0
    %v1131 = vand.u32 %v112, 4294901760
    %v1132 = vsub.f32 %v112, %v1131
    %v1133 = vand.u32 %v1132, 4294901760
    %1134 = vmatpush.msra.mxu0 %v1133
    %v1135 = vand.u32 %v111, 4294901760
    %v1136 = vsub.f32 %v111, %v1135
    %v1137 = vand.u32 %v1136, 4294901760
    %1138 = vmatpush.msra.mxu0 %v1137
    %v1139 = vand.u32 %v110, 4294901760
    %v1140 = vsub.f32 %v110, %v1139
    %v1141 = vand.u32 %v1140, 4294901760
    %1142 = vmatpush.msra.mxu0 %v1141
    %v1143 = vand.u32 %v109, 4294901760
    %v1144 = vsub.f32 %v109, %v1143
    %v1145 = vand.u32 %v1144, 4294901760
    %1146 = vmatpush.msra.mxu0 %v1145
    %v1147 = vand.u32 %v108, 4294901760
    %v1148 = vsub.f32 %v108, %v1147
    %v1149 = vand.u32 %v1148, 4294901760
    %1150 = vmatpush.msra.mxu0 %v1149
    %v1151 = vand.u32 %v107, 4294901760
    %v1152 = vsub.f32 %v107, %v1151
    %v1153 = vand.u32 %v1152, 4294901760
    %1154 = vmatpush.msra.mxu0 %v1153
    %v1155 = vand.u32 %v106, 4294901760
    %v1156 = vsub.f32 %v106, %v1155
    %v1157 = vand.u32 %v1156, 4294901760
    %1158 = vmatpush.msra.mxu0 %v1157
    %v1159 = vand.u32 %v105, 4294901760
    %v1160 = vsub.f32 %v105, %v1159
    %v1161 = vand.u32 %v1160, 4294901760
    %1162 = vmatpush.msra.mxu0 %v1161
    %v1163 = vand.u32 %v104, 4294901760
    %v1164 = vsub.f32 %v104, %v1163
    %v1165 = vand.u32 %v1164, 4294901760
    %1166 = vmatpush.msra.mxu0 %v1165
    %v1167 = vand.u32 %v103, 4294901760
    %v1168 = vsub.f32 %v103, %v1167
    %v1169 = vand.u32 %v1168, 4294901760
    %1170 = vmatpush.msra.mxu0 %v1169
    %v1171 = vand.u32 %v102, 4294901760
    %v1172 = vsub.f32 %v102, %v1171
    %v1173 = vand.u32 %v1172, 4294901760
    %1174 = vmatpush.msra.mxu0 %v1173
    %v1175 = vand.u32 %v101, 4294901760
    %v1176 = vsub.f32 %v101, %v1175
    %v1177 = vand.u32 %v1176, 4294901760
    %1178 = vmatpush.msra.mxu0 %v1177
    %v1179 = vand.u32 %v100, 4294901760
    %v1180 = vsub.f32 %v100, %v1179
    %v1181 = vand.u32 %v1180, 4294901760
    %1182 = vmatpush.msra.mxu0 %v1181
    %v1183 = vand.u32 %v99, 4294901760
    %v1184 = vsub.f32 %v99, %v1183
    %v1185 = vand.u32 %v1184, 4294901760
    %1186 = vmatpush.msra.mxu0 %v1185
    %v1187 = vand.u32 %v98, 4294901760
    %v1188 = vsub.f32 %v98, %v1187
    %v1189 = vand.u32 %v1188, 4294901760
    %1190 = vmatpush.msra.mxu0 %v1189
    %v1191 = vand.u32 %v97, 4294901760
    %v1192 = vsub.f32 %v97, %v1191
    %v1193 = vand.u32 %v1192, 4294901760
    %1194 = vmatpush.msra.mxu0 %v1193
    %v1195 = vand.u32 %v59, 4294901760
    %1196 = vmatmul.f32.gmra.mxu0 %v1195
    %v1197 = vpop.f32.mrf.mxu0
    %v1198 = vadd.f32 %v1123, %v1197
    %v1199 = vand.u32 %v63, 4294901760
    %1200 = vmatmul.f32.gmra.mxu0 %v1199
    %v1201 = vpop.f32.mrf.mxu0
    %v1202 = vadd.f32 %v1129, %v1201
    %1203 = vdwg.mxu0
    %v1204 = vand.u32 %v112, 4294901760
    %1205 = vmatpush.msra.mxu0 %v1204
    %v1206 = vand.u32 %v111, 4294901760
    %1207 = vmatpush.msra.mxu0 %v1206
    %v1208 = vand.u32 %v110, 4294901760
    %1209 = vmatpush.msra.mxu0 %v1208
    %v1210 = vand.u32 %v109, 4294901760
    %1211 = vmatpush.msra.mxu0 %v1210
    %v1212 = vand.u32 %v108, 4294901760
    %1213 = vmatpush.msra.mxu0 %v1212
    %v1214 = vand.u32 %v107, 4294901760
    %1215 = vmatpush.msra.mxu0 %v1214
    %v1216 = vand.u32 %v106, 4294901760
    %1217 = vmatpush.msra.mxu0 %v1216
    %v1218 = vand.u32 %v105, 4294901760
    %1219 = vmatpush.msra.mxu0 %v1218
    %v1220 = vand.u32 %v104, 4294901760
    %1221 = vmatpush.msra.mxu0 %v1220
    %v1222 = vand.u32 %v103, 4294901760
    %1223 = vmatpush.msra.mxu0 %v1222
    %v1224 = vand.u32 %v102, 4294901760
    %1225 = vmatpush.msra.mxu0 %v1224
    %v1226 = vand.u32 %v101, 4294901760
    %1227 = vmatpush.msra.mxu0 %v1226
    %v1228 = vand.u32 %v100, 4294901760
    %1229 = vmatpush.msra.mxu0 %v1228
    %v1230 = vand.u32 %v99, 4294901760
    %1231 = vmatpush.msra.mxu0 %v1230
    %v1232 = vand.u32 %v98, 4294901760
    %1233 = vmatpush.msra.mxu0 %v1232
    %v1234 = vand.u32 %v97, 4294901760
    %1235 = vmatpush.msra.mxu0 %v1234
    %v1236 = vand.u32 %v59, 4294901760
    %1237 = vmatmul.f32.gmra.mxu0 %v1236
    %v1238 = vpop.f32.mrf.mxu0
    %v1239 = vadd.f32 %v1198, %v1238
    %v1240 = vand.u32 %v63, 4294901760
    %1241 = vmatmul.f32.gmra.mxu0 %v1240
    %v1242 = vpop.f32.mrf.mxu0
    %v1243 = vadd.f32 %v1202, %v1242
    %1244 = vdwg.mxu0
    %v1245 = vand.u32 %v128, 4294901760
    %1246 = vmatpush.msra.mxu0 %v1245
    %v1247 = vand.u32 %v127, 4294901760
    %1248 = vmatpush.msra.mxu0 %v1247
    %v1249 = vand.u32 %v126, 4294901760
    %1250 = vmatpush.msra.mxu0 %v1249
    %v1251 = vand.u32 %v125, 4294901760
    %1252 = vmatpush.msra.mxu0 %v1251
    %v1253 = vand.u32 %v124, 4294901760
    %1254 = vmatpush.msra.mxu0 %v1253
    %v1255 = vand.u32 %v123, 4294901760
    %1256 = vmatpush.msra.mxu0 %v1255
    %v1257 = vand.u32 %v122, 4294901760
    %1258 = vmatpush.msra.mxu0 %v1257
    %v1259 = vand.u32 %v121, 4294901760
    %1260 = vmatpush.msra.mxu0 %v1259
    %v1261 = vand.u32 %v120, 4294901760
    %1262 = vmatpush.msra.mxu0 %v1261
    %v1263 = vand.u32 %v119, 4294901760
    %1264 = vmatpush.msra.mxu0 %v1263
    %v1265 = vand.u32 %v118, 4294901760
    %1266 = vmatpush.msra.mxu0 %v1265
    %v1267 = vand.u32 %v117, 4294901760
    %1268 = vmatpush.msra.mxu0 %v1267
    %v1269 = vand.u32 %v116, 4294901760
    %1270 = vmatpush.msra.mxu0 %v1269
    %v1271 = vand.u32 %v115, 4294901760
    %1272 = vmatpush.msra.mxu0 %v1271
    %v1273 = vand.u32 %v114, 4294901760
    %1274 = vmatpush.msra.mxu0 %v1273
    %v1275 = vand.u32 %v113, 4294901760
    %1276 = vmatpush.msra.mxu0 %v1275
    %v1277 = vand.u32 %v60, 4294901760
    %v1278 = vsub.f32 %v60, %v1277
    %v1279 = vand.u32 %v1278, 4294901760
    %v1280 = vsub.f32 %v1278, %v1279
    %v1281 = vand.u32 %v1280, 4294901760
    %1282 = vmatmul.f32.gmra.mxu0 %v1281
    %v1283 = vpop.f32.mrf.mxu0
    %v1284 = vadd.f32 %v1239, %v1283
    %v1285 = vand.u32 %v64, 4294901760
    %v1286 = vsub.f32 %v64, %v1285
    %v1287 = vand.u32 %v1286, 4294901760
    %v1288 = vsub.f32 %v1286, %v1287
    %v1289 = vand.u32 %v1288, 4294901760
    %1290 = vmatmul.f32.gmra.mxu0 %v1289
    %v1291 = vpop.f32.mrf.mxu0
    %v1292 = vadd.f32 %v1243, %v1291
    %1293 = vdwg.mxu0
    %v1294 = vand.u32 %v128, 4294901760
    %v1295 = vsub.f32 %v128, %v1294
    %v1296 = vand.u32 %v1295, 4294901760
    %v1297 = vsub.f32 %v1295, %v1296
    %v1298 = vand.u32 %v1297, 4294901760
    %1299 = vmatpush.msra.mxu0 %v1298
    %v1300 = vand.u32 %v127, 4294901760
    %v1301 = vsub.f32 %v127, %v1300
    %v1302 = vand.u32 %v1301, 4294901760
    %v1303 = vsub.f32 %v1301, %v1302
    %v1304 = vand.u32 %v1303, 4294901760
    %1305 = vmatpush.msra.mxu0 %v1304
    %v1306 = vand.u32 %v126, 4294901760
    %v1307 = vsub.f32 %v126, %v1306
    %v1308 = vand.u32 %v1307, 4294901760
    %v1309 = vsub.f32 %v1307, %v1308
    %v1310 = vand.u32 %v1309, 4294901760
    %1311 = vmatpush.msra.mxu0 %v1310
    %v1312 = vand.u32 %v125, 4294901760
    %v1313 = vsub.f32 %v125, %v1312
    %v1314 = vand.u32 %v1313, 4294901760
    %v1315 = vsub.f32 %v1313, %v1314
    %v1316 = vand.u32 %v1315, 4294901760
    %1317 = vmatpush.msra.mxu0 %v1316
    %v1318 = vand.u32 %v124, 4294901760
    %v1319 = vsub.f32 %v124, %v1318
    %v1320 = vand.u32 %v1319, 4294901760
    %v1321 = vsub.f32 %v1319, %v1320
    %v1322 = vand.u32 %v1321, 4294901760
    %1323 = vmatpush.msra.mxu0 %v1322
    %v1324 = vand.u32 %v123, 4294901760
    %v1325 = vsub.f32 %v123, %v1324
    %v1326 = vand.u32 %v1325, 4294901760
    %v1327 = vsub.f32 %v1325, %v1326
    %v1328 = vand.u32 %v1327, 4294901760
    %1329 = vmatpush.msra.mxu0 %v1328
    %v1330 = vand.u32 %v122, 4294901760
    %v1331 = vsub.f32 %v122, %v1330
    %v1332 = vand.u32 %v1331, 4294901760
    %v1333 = vsub.f32 %v1331, %v1332
    %v1334 = vand.u32 %v1333, 4294901760
    %1335 = vmatpush.msra.mxu0 %v1334
    %v1336 = vand.u32 %v121, 4294901760
    %v1337 = vsub.f32 %v121, %v1336
    %v1338 = vand.u32 %v1337, 4294901760
    %v1339 = vsub.f32 %v1337, %v1338
    %v1340 = vand.u32 %v1339, 4294901760
    %1341 = vmatpush.msra.mxu0 %v1340
    %v1342 = vand.u32 %v120, 4294901760
    %v1343 = vsub.f32 %v120, %v1342
    %v1344 = vand.u32 %v1343, 4294901760
    %v1345 = vsub.f32 %v1343, %v1344
    %v1346 = vand.u32 %v1345, 4294901760
    %1347 = vmatpush.msra.mxu0 %v1346
    %v1348 = vand.u32 %v119, 4294901760
    %v1349 = vsub.f32 %v119, %v1348
    %v1350 = vand.u32 %v1349, 4294901760
    %v1351 = vsub.f32 %v1349, %v1350
    %v1352 = vand.u32 %v1351, 4294901760
    %1353 = vmatpush.msra.mxu0 %v1352
    %v1354 = vand.u32 %v118, 4294901760
    %v1355 = vsub.f32 %v118, %v1354
    %v1356 = vand.u32 %v1355, 4294901760
    %v1357 = vsub.f32 %v1355, %v1356
    %v1358 = vand.u32 %v1357, 4294901760
    %1359 = vmatpush.msra.mxu0 %v1358
    %v1360 = vand.u32 %v117, 4294901760
    %v1361 = vsub.f32 %v117, %v1360
    %v1362 = vand.u32 %v1361, 4294901760
    %v1363 = vsub.f32 %v1361, %v1362
    %v1364 = vand.u32 %v1363, 4294901760
    %1365 = vmatpush.msra.mxu0 %v1364
    %v1366 = vand.u32 %v116, 4294901760
    %v1367 = vsub.f32 %v116, %v1366
    %v1368 = vand.u32 %v1367, 4294901760
    %v1369 = vsub.f32 %v1367, %v1368
    %v1370 = vand.u32 %v1369, 4294901760
    %1371 = vmatpush.msra.mxu0 %v1370
    %v1372 = vand.u32 %v115, 4294901760
    %v1373 = vsub.f32 %v115, %v1372
    %v1374 = vand.u32 %v1373, 4294901760
    %v1375 = vsub.f32 %v1373, %v1374
    %v1376 = vand.u32 %v1375, 4294901760
    %1377 = vmatpush.msra.mxu0 %v1376
    %v1378 = vand.u32 %v114, 4294901760
    %v1379 = vsub.f32 %v114, %v1378
    %v1380 = vand.u32 %v1379, 4294901760
    %v1381 = vsub.f32 %v1379, %v1380
    %v1382 = vand.u32 %v1381, 4294901760
    %1383 = vmatpush.msra.mxu0 %v1382
    %v1384 = vand.u32 %v113, 4294901760
    %v1385 = vsub.f32 %v113, %v1384
    %v1386 = vand.u32 %v1385, 4294901760
    %v1387 = vsub.f32 %v1385, %v1386
    %v1388 = vand.u32 %v1387, 4294901760
    %1389 = vmatpush.msra.mxu0 %v1388
    %v1390 = vand.u32 %v60, 4294901760
    %1391 = vmatmul.f32.gmra.mxu0 %v1390
    %v1392 = vpop.f32.mrf.mxu0
    %v1393 = vadd.f32 %v1284, %v1392
    %v1394 = vand.u32 %v64, 4294901760
    %1395 = vmatmul.f32.gmra.mxu0 %v1394
    %v1396 = vpop.f32.mrf.mxu0
    %v1397 = vadd.f32 %v1292, %v1396
    %1398 = vdwg.mxu0
    %v1399 = vand.u32 %v128, 4294901760
    %v1400 = vsub.f32 %v128, %v1399
    %1401 = vmatpush.msra.mxu0 %v1400
    %v1402 = vand.u32 %v127, 4294901760
    %v1403 = vsub.f32 %v127, %v1402
    %1404 = vmatpush.msra.mxu0 %v1403
    %v1405 = vand.u32 %v126, 4294901760
    %v1406 = vsub.f32 %v126, %v1405
    %1407 = vmatpush.msra.mxu0 %v1406
    %v1408 = vand.u32 %v125, 4294901760
    %v1409 = vsub.f32 %v125, %v1408
    %1410 = vmatpush.msra.mxu0 %v1409
    %v1411 = vand.u32 %v124, 4294901760
    %v1412 = vsub.f32 %v124, %v1411
    %1413 = vmatpush.msra.mxu0 %v1412
    %v1414 = vand.u32 %v123, 4294901760
    %v1415 = vsub.f32 %v123, %v1414
    %1416 = vmatpush.msra.mxu0 %v1415
    %v1417 = vand.u32 %v122, 4294901760
    %v1418 = vsub.f32 %v122, %v1417
    %1419 = vmatpush.msra.mxu0 %v1418
    %v1420 = vand.u32 %v121, 4294901760
    %v1421 = vsub.f32 %v121, %v1420
    %1422 = vmatpush.msra.mxu0 %v1421
    %v1423 = vand.u32 %v120, 4294901760
    %v1424 = vsub.f32 %v120, %v1423
    %1425 = vmatpush.msra.mxu0 %v1424
    %v1426 = vand.u32 %v119, 4294901760
    %v1427 = vsub.f32 %v119, %v1426
    %1428 = vmatpush.msra.mxu0 %v1427
    %v1429 = vand.u32 %v118, 4294901760
    %v1430 = vsub.f32 %v118, %v1429
    %1431 = vmatpush.msra.mxu0 %v1430
    %v1432 = vand.u32 %v117, 4294901760
    %v1433 = vsub.f32 %v117, %v1432
    %1434 = vmatpush.msra.mxu0 %v1433
    %v1435 = vand.u32 %v116, 4294901760
    %v1436 = vsub.f32 %v116, %v1435
    %1437 = vmatpush.msra.mxu0 %v1436
    %v1438 = vand.u32 %v115, 4294901760
    %v1439 = vsub.f32 %v115, %v1438
    %1440 = vmatpush.msra.mxu0 %v1439
    %v1441 = vand.u32 %v114, 4294901760
    %v1442 = vsub.f32 %v114, %v1441
    %1443 = vmatpush.msra.mxu0 %v1442
    %v1444 = vand.u32 %v113, 4294901760
    %v1445 = vsub.f32 %v113, %v1444
    %1446 = vmatpush.msra.mxu0 %v1445
    %v1447 = vand.u32 %v60, 4294901760
    %v1448 = vsub.f32 %v60, %v1447
    %1449 = vmatmul.f32.gmra.mxu0 %v1448
    %v1450 = vpop.f32.mrf.mxu0
    %v1451 = vadd.f32 %v1393, %v1450
    %v1452 = vand.u32 %v64, 4294901760
    %v1453 = vsub.f32 %v64, %v1452
    %1454 = vmatmul.f32.gmra.mxu0 %v1453
    %v1455 = vpop.f32.mrf.mxu0
    %v1456 = vadd.f32 %v1397, %v1455
    %1457 = vdwg.mxu0
    %v1458 = vand.u32 %v128, 4294901760
    %1459 = vmatpush.msra.mxu0 %v1458
    %v1460 = vand.u32 %v127, 4294901760
    %1461 = vmatpush.msra.mxu0 %v1460
    %v1462 = vand.u32 %v126, 4294901760
    %1463 = vmatpush.msra.mxu0 %v1462
    %v1464 = vand.u32 %v125, 4294901760
    %1465 = vmatpush.msra.mxu0 %v1464
    %v1466 = vand.u32 %v124, 4294901760
    %1467 = vmatpush.msra.mxu0 %v1466
    %v1468 = vand.u32 %v123, 4294901760
    %1469 = vmatpush.msra.mxu0 %v1468
    %v1470 = vand.u32 %v122, 4294901760
    %1471 = vmatpush.msra.mxu0 %v1470
    %v1472 = vand.u32 %v121, 4294901760
    %1473 = vmatpush.msra.mxu0 %v1472
    %v1474 = vand.u32 %v120, 4294901760
    %1475 = vmatpush.msra.mxu0 %v1474
    %v1476 = vand.u32 %v119, 4294901760
    %1477 = vmatpush.msra.mxu0 %v1476
    %v1478 = vand.u32 %v118, 4294901760
    %1479 = vmatpush.msra.mxu0 %v1478
    %v1480 = vand.u32 %v117, 4294901760
    %1481 = vmatpush.msra.mxu0 %v1480
    %v1482 = vand.u32 %v116, 4294901760
    %1483 = vmatpush.msra.mxu0 %v1482
    %v1484 = vand.u32 %v115, 4294901760
    %1485 = vmatpush.msra.mxu0 %v1484
    %v1486 = vand.u32 %v114, 4294901760
    %1487 = vmatpush.msra.mxu0 %v1486
    %v1488 = vand.u32 %v113, 4294901760
    %1489 = vmatpush.msra.mxu0 %v1488
    %v1490 = vand.u32 %v60, 4294901760
    %v1491 = vsub.f32 %v60, %v1490
    %v1492 = vand.u32 %v1491, 4294901760
    %1493 = vmatmul.f32.gmra.mxu0 %v1492
    %v1494 = vpop.f32.mrf.mxu0
    %v1495 = vadd.f32 %v1451, %v1494
    %v1496 = vand.u32 %v64, 4294901760
    %v1497 = vsub.f32 %v64, %v1496
    %v1498 = vand.u32 %v1497, 4294901760
    %1499 = vmatmul.f32.gmra.mxu0 %v1498
    %v1500 = vpop.f32.mrf.mxu0
    %v1501 = vadd.f32 %v1456, %v1500
    %1502 = vdwg.mxu0
    %v1503 = vand.u32 %v128, 4294901760
    %v1504 = vsub.f32 %v128, %v1503
    %v1505 = vand.u32 %v1504, 4294901760
    %1506 = vmatpush.msra.mxu0 %v1505
    %v1507 = vand.u32 %v127, 4294901760
    %v1508 = vsub.f32 %v127, %v1507
    %v1509 = vand.u32 %v1508, 4294901760
    %1510 = vmatpush.msra.mxu0 %v1509
    %v1511 = vand.u32 %v126, 4294901760
    %v1512 = vsub.f32 %v126, %v1511
    %v1513 = vand.u32 %v1512, 4294901760
    %1514 = vmatpush.msra.mxu0 %v1513
    %v1515 = vand.u32 %v125, 4294901760
    %v1516 = vsub.f32 %v125, %v1515
    %v1517 = vand.u32 %v1516, 4294901760
    %1518 = vmatpush.msra.mxu0 %v1517
    %v1519 = vand.u32 %v124, 4294901760
    %v1520 = vsub.f32 %v124, %v1519
    %v1521 = vand.u32 %v1520, 4294901760
    %1522 = vmatpush.msra.mxu0 %v1521
    %v1523 = vand.u32 %v123, 4294901760
    %v1524 = vsub.f32 %v123, %v1523
    %v1525 = vand.u32 %v1524, 4294901760
    %1526 = vmatpush.msra.mxu0 %v1525
    %v1527 = vand.u32 %v122, 4294901760
    %v1528 = vsub.f32 %v122, %v1527
    %v1529 = vand.u32 %v1528, 4294901760
    %1530 = vmatpush.msra.mxu0 %v1529
    %v1531 = vand.u32 %v121, 4294901760
    %v1532 = vsub.f32 %v121, %v1531
    %v1533 = vand.u32 %v1532, 4294901760
    %1534 = vmatpush.msra.mxu0 %v1533
    %v1535 = vand.u32 %v120, 4294901760
    %v1536 = vsub.f32 %v120, %v1535
    %v1537 = vand.u32 %v1536, 4294901760
    %1538 = vmatpush.msra.mxu0 %v1537
    %v1539 = vand.u32 %v119, 4294901760
    %v1540 = vsub.f32 %v119, %v1539
    %v1541 = vand.u32 %v1540, 4294901760
    %1542 = vmatpush.msra.mxu0 %v1541
    %v1543 = vand.u32 %v118, 4294901760
    %v1544 = vsub.f32 %v118, %v1543
    %v1545 = vand.u32 %v1544, 4294901760
    %1546 = vmatpush.msra.mxu0 %v1545
    %v1547 = vand.u32 %v117, 4294901760
    %v1548 = vsub.f32 %v117, %v1547
    %v1549 = vand.u32 %v1548, 4294901760
    %1550 = vmatpush.msra.mxu0 %v1549
    %v1551 = vand.u32 %v116, 4294901760
    %v1552 = vsub.f32 %v116, %v1551
    %v1553 = vand.u32 %v1552, 4294901760
    %1554 = vmatpush.msra.mxu0 %v1553
    %v1555 = vand.u32 %v115, 4294901760
    %v1556 = vsub.f32 %v115, %v1555
    %v1557 = vand.u32 %v1556, 4294901760
    %1558 = vmatpush.msra.mxu0 %v1557
    %v1559 = vand.u32 %v114, 4294901760
    %v1560 = vsub.f32 %v114, %v1559
    %v1561 = vand.u32 %v1560, 4294901760
    %1562 = vmatpush.msra.mxu0 %v1561
    %v1563 = vand.u32 %v113, 4294901760
    %v1564 = vsub.f32 %v113, %v1563
    %v1565 = vand.u32 %v1564, 4294901760
    %1566 = vmatpush.msra.mxu0 %v1565
    %v1567 = vand.u32 %v60, 4294901760
    %1568 = vmatmul.f32.gmra.mxu0 %v1567
    %v1569 = vpop.f32.mrf.mxu0
    %v1570 = vadd.f32 %v1495, %v1569
    %v1571 = vand.u32 %v64, 4294901760
    %1572 = vmatmul.f32.gmra.mxu0 %v1571
    %v1573 = vpop.f32.mrf.mxu0
    %v1574 = vadd.f32 %v1501, %v1573
    %1575 = vdwg.mxu0
    %v1576 = vand.u32 %v128, 4294901760
    %1577 = vmatpush.msra.mxu0 %v1576
    %v1578 = vand.u32 %v127, 4294901760
    %1579 = vmatpush.msra.mxu0 %v1578
    %v1580 = vand.u32 %v126, 4294901760
    %1581 = vmatpush.msra.mxu0 %v1580
    %v1582 = vand.u32 %v125, 4294901760
    %1583 = vmatpush.msra.mxu0 %v1582
    %v1584 = vand.u32 %v124, 4294901760
    %1585 = vmatpush.msra.mxu0 %v1584
    %v1586 = vand.u32 %v123, 4294901760
    %1587 = vmatpush.msra.mxu0 %v1586
    %v1588 = vand.u32 %v122, 4294901760
    %1589 = vmatpush.msra.mxu0 %v1588
    %v1590 = vand.u32 %v121, 4294901760
    %1591 = vmatpush.msra.mxu0 %v1590
    %v1592 = vand.u32 %v120, 4294901760
    %1593 = vmatpush.msra.mxu0 %v1592
    %v1594 = vand.u32 %v119, 4294901760
    %1595 = vmatpush.msra.mxu0 %v1594
    %v1596 = vand.u32 %v118, 4294901760
    %1597 = vmatpush.msra.mxu0 %v1596
    %v1598 = vand.u32 %v117, 4294901760
    %1599 = vmatpush.msra.mxu0 %v1598
    %v1600 = vand.u32 %v116, 4294901760
    %1601 = vmatpush.msra.mxu0 %v1600
    %v1602 = vand.u32 %v115, 4294901760
    %1603 = vmatpush.msra.mxu0 %v1602
    %v1604 = vand.u32 %v114, 4294901760
    %1605 = vmatpush.msra.mxu0 %v1604
    %v1606 = vand.u32 %v113, 4294901760
    %1607 = vmatpush.msra.mxu0 %v1606
    %v1608 = vand.u32 %v60, 4294901760
    %1609 = vmatmul.f32.gmra.mxu0 %v1608
    %v1610 = vpop.f32.mrf.mxu0
    %v1611 = vadd.f32 %v1570, %v1610
    %v1612 = vand.u32 %v64, 4294901760
    %1613 = vmatmul.f32.gmra.mxu0 %v1612
    %v1614 = vpop.f32.mrf.mxu0
    %v1615 = vadd.f32 %v1574, %v1614
    %1616 = vdwg.mxu0
    %1617 = vst [vmem:[#allocation5] sm:$0xff] %v1611
    %1618 = vst [vmem:[#allocation5 + $0x8] sm:$0xff] %v1615
    // Predicated region
    $region14: #{tpu_custom_call.1} parent=1 // pred_check
      _
    $region15: #{tpu_custom_call.1} parent=1 // pred_check_branch
      %1620 = sbr.rel (0) target = $region17
    $region16: #{tpu_custom_call.1} parent=1 // pred_region
      %1622 = vsyncadd [#allocation4], 0
      %s1623 = sshll.u32 [#allocation5], 4
      %s1624 = int_to_ptr.vmem [resolvable:$true] %s1623
      %s1625 = sshll.u32 %s2, 4
      %s1626 = int_to_ptr.hbm [resolvable:$true] %s1625
      %1631 = dma.vmem_to_hbm [thread:$0]  %s1624, 256, %s1626, [#allocation4], 128, 128, 8
    $region17: #{tpu_custom_call.1} parent=1 // pred_fallthru
      _
    // Predicated region
    $region18: #{tpu_custom_call.1} parent=1 // pred_check
      _
    $region19: #{tpu_custom_call.1} parent=1 // pred_check_branch
      %1633 = sbr.rel (0) target = $region21
    $region20: #{tpu_custom_call.1} parent=1 // pred_region
      %1635 = dma.done [#allocation4], 256
    $region21: #{tpu_custom_call.1} parent=1 // pred_fallthru
      _
    %1636 = vsyncpa [#allocation3], 1
    %1637 = vsyncpa [#allocation4], 1

</llo_original>
